<compile_context>
chip_gen: v7x
topology: tpu7x:2x2x1
jax: 0.10.0
libtpu: 0.0.40
codegen_flags: <defaults>
</compile_context>

<pallas_src>
import jax
import jax.numpy as jnp
from jax.experimental import pallas as pl
from jax.experimental.pallas import tpu as pltpu


def make_block_forward(n_feat, kernel_size, H, W, res_scale=1.0,
                       compute_dtype=jnp.bfloat16):
    assert kernel_size % 2 == 1, "same-size output requires odd kernel_size"
    C = n_feat
    K = kernel_size
    P = K // 2
    KK = K * K
    HW = H * W
    n_layers = 4
    # Tap offsets in row-major (dy, dx) order, matching the weight layout.
    offs = [(dy - P, dx - P) for dy in range(K) for dx in range(K)]

    def kernel(x_ref, w_ref, b_ref, m_ref, o_ref):
        # x_ref: (1, C, HW)              input image, lane-dense spatial
        # w_ref: (n_layers, C, KK*C)     per-layer tap-fused (C_out, KK*C_in)
        # b_ref: (n_layers, C, 1)        f32 biases
        # m_ref: (KK, 1, HW)             per-tap validity masks (zero padding)
        # o_ref: (1, C, HW)              output
        cur = x_ref[0].astype(jnp.float32)                      # (C, HW) f32
        for layer in range(n_layers):
            # One cast per layer; rolls / mask-muls then run on compute dtype.
            cur_c = cur.astype(compute_dtype)                   # (C, HW)
            planes = []
            for t, (oy, ox) in enumerate(offs):
                d = oy * W + ox                                 # flat shift
                if d == 0:
                    shifted = cur_c                             # center tap
                else:
                    # shifted[:, i] = cur_c[:, i + d]; wrap-around is masked.
                    shifted = pltpu.roll(cur_c, shift=(-d) % HW, axis=1)
                    shifted = shifted * m_ref[t]                # zero padding
                planes.append(shifted)
            stacked = jnp.concatenate(planes, axis=0)           # (KK*C, HW)
            # Single MXU matmul per layer, f32 accumulation.
            acc = jnp.dot(w_ref[layer], stacked,
                          preferred_element_type=jnp.float32)   # (C, HW) f32
            acc = acc + b_ref[layer]                            # (C,1) bcast
            if layer == 0:
                acc = jnp.maximum(acc, 0.0)                     # act = ReLU
            cur = acc
        if res_scale != 1.0:                                    # trace-time
            cur = cur * res_scale
        o_ref[0] = cur.astype(o_ref.dtype)

    def forward(x, w, b):
        # x: (N, C, H, W); w: (n_layers, C, C, K, K) OIHW; b: (n_layers, C)
        N = x.shape[0]
        x2 = x.reshape(N, C, HW)                                # lane-dense
        # (L, O, I, Ky, Kx) -> (L, O, Ky, Kx, I) -> (L, O, KK*I) so column
        # (t*C + i) of layer l is w[l, :, i, dy, dx] with t = dy*K + dx,
        # matching the order the kernel stacks the shifted planes.
        w_r = jnp.transpose(w, (0, 1, 3, 4, 2))
        w_r = w_r.reshape(n_layers, C, KK * C).astype(compute_dtype)
        b_r = b.astype(jnp.float32).reshape(n_layers, C, 1)

        # Per-tap boundary masks (same for every layer / image), in the
        # compute dtype so the in-kernel multiply stays bf16 in perf config.
        idx = jnp.arange(HW)
        yy, xx = idx // W, idx % W
        masks = jnp.stack([
            ((yy + oy >= 0) & (yy + oy < H) &
             (xx + ox >= 0) & (xx + ox < W))
            for (oy, ox) in offs
        ]).astype(compute_dtype).reshape(KK, 1, HW)

        grid_spec = pltpu.PrefetchScalarGridSpec(
            num_scalar_prefetch=0,
            grid=(N,),
            in_specs=[
                pl.BlockSpec((1, C, HW), lambda n: (n, 0, 0)),
                pl.BlockSpec((n_layers, C, KK * C), lambda n: (0, 0, 0)),
                pl.BlockSpec((n_layers, C, 1), lambda n: (0, 0, 0)),
                pl.BlockSpec((KK, 1, HW), lambda n: (0, 0, 0)),
            ],
            out_specs=pl.BlockSpec((1, C, HW), lambda n: (n, 0, 0)),
        )
        out = pl.pallas_call(
            kernel,
            out_shape=jax.ShapeDtypeStruct((N, C, HW), x.dtype),
            grid_spec=grid_spec,
            compiler_params=pltpu.CompilerParams(
                dimension_semantics=("parallel",)),
        )(x2, w_r, b_r, masks)
        return out.reshape(N, C, H, W)

    return forward


def block_ref(x, w, b, res_scale=1.0):
    """Pure-JAX reference matching the PyTorch Block.forward."""
    P = w.shape[-1] // 2
    cur = x.astype(jnp.float32)
    for l in range(w.shape[0]):
        cur = jax.lax.conv_general_dilated(
            cur, w[l].astype(jnp.float32), window_strides=(1, 1),
            padding=((P, P), (P, P)),
            dimension_numbers=('NCHW', 'OIHW', 'NCHW'),
            precision=jax.lax.Precision.HIGHEST)
        cur = cur + b[l].astype(jnp.float32)[None, :, None, None]
        if l == 0:
            cur = jnp.maximum(cur, 0.0)
    return (cur * res_scale).astype(x.dtype)


if __name__ == "__main__":
    N, C, H, W, K = 2, 4, 16, 16, 3
    res_scale = 1.0

    key = jax.random.PRNGKey(0)
    kx, kw, kb = jax.random.split(key, 3)
    x = jax.random.normal(kx, (N, C, H, W), jnp.float32)
    # Synthetic parameters: 4 conv layers, Conv2d(C, C, K, bias=True).
    w = jax.random.normal(kw, (4, C, C, K, K), jnp.float32) / jnp.sqrt(C * K * K)
    b = 0.1 * jax.random.normal(kb, (4, C), jnp.float32)

    ref = jax.block_until_ready(block_ref(x, w, b, res_scale))

    # 1) Structural correctness check: f32 operands, tight tolerance.
    fwd_f32 = make_block_forward(n_feat=C, kernel_size=K, H=H, W=W,
                                 res_scale=res_scale,
                                 compute_dtype=jnp.float32)
    out_f32 = jax.block_until_ready(fwd_f32(x, w, b))
    assert out_f32.shape == (N, C, H, W)
    assert out_f32.dtype == x.dtype
    if not jnp.allclose(out_f32, ref, atol=1e-3, rtol=1e-3):
        raise AssertionError("f32 Pallas Block kernel mismatch vs reference")

    # 2) Performance configuration: bf16 MXU operands, f32 accumulation.
    #    Four chained conv layers of bf16-operand rounding => bf16-appropriate
    #    tolerance against the f32 reference.
    fwd_bf16 = make_block_forward(n_feat=C, kernel_size=K, H=H, W=W,
                                  res_scale=res_scale,
                                  compute_dtype=jnp.bfloat16)
    out_bf16 = jax.block_until_ready(fwd_bf16(x, w, b))
    assert out_bf16.shape == (N, C, H, W)
    assert out_bf16.dtype == x.dtype
    if not jnp.allclose(out_bf16, ref, atol=1e-1, rtol=5e-2):
        raise AssertionError("bf16 Pallas Block kernel mismatch vs reference")

    print("KERNEL_OK")
</pallas_src>

<mosaic_0001>
module attributes {stable_mosaic.version = 11 : i64} {
  func.func @kernel(%arg0: i32, %arg1: memref<1x4x256xf32, #tpu.memory_space<vmem>>, %arg2: memref<4x4x36xf32, #tpu.memory_space<vmem>>, %arg3: memref<4x4x1xf32, #tpu.memory_space<vmem>>, %arg4: memref<9x1x256xf32, #tpu.memory_space<vmem>>, %arg5: memref<1x4x256xf32, #tpu.memory_space<vmem>>) attributes {dimension_semantics = [#tpu.dimension_semantics<parallel>], iteration_bounds = array<i64: 2>, scalar_prefetch = 0 : i64, scratch_operands = 0 : i64, tpu.core_type = #tpu.core_type<tc>, window_params = [{transform_indices = @transform_0, window_bounds = array<i64: 1, 4, 256>}, {pipeline_mode = #tpu.pipeline_mode<synchronous>, transform_indices = @transform_1, window_bounds = array<i64: 4, 4, 36>}, {pipeline_mode = #tpu.pipeline_mode<synchronous>, transform_indices = @transform_2, window_bounds = array<i64: 4, 4, 1>}, {pipeline_mode = #tpu.pipeline_mode<synchronous>, transform_indices = @transform_3, window_bounds = array<i64: 9, 1, 256>}, {transform_indices = @transform_4, window_bounds = array<i64: 1, 4, 256>}]} {
    %c0 = arith.constant 0 : index
    %c0_0 = arith.constant 0 : index
    %c0_1 = arith.constant 0 : index
    %0 = vector.load %arg1[%c0, %c0_0, %c0_1] : memref<1x4x256xf32, #tpu.memory_space<vmem>>, vector<1x4x256xf32>
    %1 = vector.shape_cast %0 : vector<1x4x256xf32> to vector<4x256xf32>
    %c17_i32 = arith.constant 17 : i32
    %2 = tpu.dynamic_rotate %1 by %c17_i32 dim 1 : vector<4x256xf32>, i32 -> vector<4x256xf32>
    %c0_2 = arith.constant 0 : index
    %c0_3 = arith.constant 0 : index
    %c0_4 = arith.constant 0 : index
    %3 = vector.load %arg4[%c0_2, %c0_3, %c0_4] : memref<9x1x256xf32, #tpu.memory_space<vmem>>, vector<1x1x256xf32>
    %4 = vector.shape_cast %3 : vector<1x1x256xf32> to vector<1x256xf32>
    %5 = vector.broadcast %4 : vector<1x256xf32> to vector<4x256xf32>
    %6 = arith.mulf %2, %5 : vector<4x256xf32>
    %c16_i32 = arith.constant 16 : i32
    %7 = tpu.dynamic_rotate %1 by %c16_i32 dim 1 : vector<4x256xf32>, i32 -> vector<4x256xf32>
    %c1 = arith.constant 1 : index
    %c0_5 = arith.constant 0 : index
    %c0_6 = arith.constant 0 : index
    %8 = vector.load %arg4[%c1, %c0_5, %c0_6] : memref<9x1x256xf32, #tpu.memory_space<vmem>>, vector<1x1x256xf32>
    %9 = vector.shape_cast %8 : vector<1x1x256xf32> to vector<1x256xf32>
    %10 = vector.broadcast %9 : vector<1x256xf32> to vector<4x256xf32>
    %11 = arith.mulf %7, %10 : vector<4x256xf32>
    %c15_i32 = arith.constant 15 : i32
    %12 = tpu.dynamic_rotate %1 by %c15_i32 dim 1 : vector<4x256xf32>, i32 -> vector<4x256xf32>
    %c2 = arith.constant 2 : index
    %c0_7 = arith.constant 0 : index
    %c0_8 = arith.constant 0 : index
    %13 = vector.load %arg4[%c2, %c0_7, %c0_8] : memref<9x1x256xf32, #tpu.memory_space<vmem>>, vector<1x1x256xf32>
    %14 = vector.shape_cast %13 : vector<1x1x256xf32> to vector<1x256xf32>
    %15 = vector.broadcast %14 : vector<1x256xf32> to vector<4x256xf32>
    %16 = arith.mulf %12, %15 : vector<4x256xf32>
    %c1_i32 = arith.constant 1 : i32
    %17 = tpu.dynamic_rotate %1 by %c1_i32 dim 1 : vector<4x256xf32>, i32 -> vector<4x256xf32>
    %c3 = arith.constant 3 : index
    %c0_9 = arith.constant 0 : index
    %c0_10 = arith.constant 0 : index
    %18 = vector.load %arg4[%c3, %c0_9, %c0_10] : memref<9x1x256xf32, #tpu.memory_space<vmem>>, vector<1x1x256xf32>
    %19 = vector.shape_cast %18 : vector<1x1x256xf32> to vector<1x256xf32>
    %20 = vector.broadcast %19 : vector<1x256xf32> to vector<4x256xf32>
    %21 = arith.mulf %17, %20 : vector<4x256xf32>
    %c255_i32 = arith.constant 255 : i32
    %22 = tpu.dynamic_rotate %1 by %c255_i32 dim 1 : vector<4x256xf32>, i32 -> vector<4x256xf32>
    %c5 = arith.constant 5 : index
    %c0_11 = arith.constant 0 : index
    %c0_12 = arith.constant 0 : index
    %23 = vector.load %arg4[%c5, %c0_11, %c0_12] : memref<9x1x256xf32, #tpu.memory_space<vmem>>, vector<1x1x256xf32>
    %24 = vector.shape_cast %23 : vector<1x1x256xf32> to vector<1x256xf32>
    %25 = vector.broadcast %24 : vector<1x256xf32> to vector<4x256xf32>
    %26 = arith.mulf %22, %25 : vector<4x256xf32>
    %c241_i32 = arith.constant 241 : i32
    %27 = tpu.dynamic_rotate %1 by %c241_i32 dim 1 : vector<4x256xf32>, i32 -> vector<4x256xf32>
    %c6 = arith.constant 6 : index
    %c0_13 = arith.constant 0 : index
    %c0_14 = arith.constant 0 : index
    %28 = vector.load %arg4[%c6, %c0_13, %c0_14] : memref<9x1x256xf32, #tpu.memory_space<vmem>>, vector<1x1x256xf32>
    %29 = vector.shape_cast %28 : vector<1x1x256xf32> to vector<1x256xf32>
    %30 = vector.broadcast %29 : vector<1x256xf32> to vector<4x256xf32>
    %31 = arith.mulf %27, %30 : vector<4x256xf32>
    %c240_i32 = arith.constant 240 : i32
    %32 = tpu.dynamic_rotate %1 by %c240_i32 dim 1 : vector<4x256xf32>, i32 -> vector<4x256xf32>
    %c7 = arith.constant 7 : index
    %c0_15 = arith.constant 0 : index
    %c0_16 = arith.constant 0 : index
    %33 = vector.load %arg4[%c7, %c0_15, %c0_16] : memref<9x1x256xf32, #tpu.memory_space<vmem>>, vector<1x1x256xf32>
    %34 = vector.shape_cast %33 : vector<1x1x256xf32> to vector<1x256xf32>
    %35 = vector.broadcast %34 : vector<1x256xf32> to vector<4x256xf32>
    %36 = arith.mulf %32, %35 : vector<4x256xf32>
    %c239_i32 = arith.constant 239 : i32
    %37 = tpu.dynamic_rotate %1 by %c239_i32 dim 1 : vector<4x256xf32>, i32 -> vector<4x256xf32>
    %c8 = arith.constant 8 : index
    %c0_17 = arith.constant 0 : index
    %c0_18 = arith.constant 0 : index
    %38 = vector.load %arg4[%c8, %c0_17, %c0_18] : memref<9x1x256xf32, #tpu.memory_space<vmem>>, vector<1x1x256xf32>
    %39 = vector.shape_cast %38 : vector<1x1x256xf32> to vector<1x256xf32>
    %40 = vector.broadcast %39 : vector<1x256xf32> to vector<4x256xf32>
    %41 = arith.mulf %37, %40 : vector<4x256xf32>
    %42 = tpu.concatenate %6, %11, %16, %21, %1, %26, %31, %36, %41 in 0 : vector<4x256xf32>, vector<4x256xf32>, vector<4x256xf32>, vector<4x256xf32>, vector<4x256xf32>, vector<4x256xf32>, vector<4x256xf32>, vector<4x256xf32>, vector<4x256xf32> -> vector<36x256xf32>
    %c0_19 = arith.constant 0 : index
    %c0_20 = arith.constant 0 : index
    %c0_21 = arith.constant 0 : index
    %43 = vector.load %arg2[%c0_19, %c0_20, %c0_21] : memref<4x4x36xf32, #tpu.memory_space<vmem>>, vector<1x4x36xf32>
    %44 = vector.shape_cast %43 : vector<1x4x36xf32> to vector<4x36xf32>
    %cst = arith.constant dense<0.000000e+00> : vector<4x256xf32>
    %45 = tpu.matmul %44, %42, %cst {dimension_numbers = #tpu.dot_dimension_numbers<[1], [0], [0], [1], [0, 0, 1, 1], [], []>} : vector<4x36xf32>, vector<36x256xf32>, vector<4x256xf32> -> vector<4x256xf32>
    %c0_22 = arith.constant 0 : index
    %c0_23 = arith.constant 0 : index
    %c0_24 = arith.constant 0 : index
    %46 = vector.load %arg3[%c0_22, %c0_23, %c0_24] : memref<4x4x1xf32, #tpu.memory_space<vmem>>, vector<1x4x1xf32>
    %47 = vector.shape_cast %46 : vector<1x4x1xf32> to vector<4x1xf32>
    %48 = vector.broadcast %47 : vector<4x1xf32> to vector<4x256xf32>
    %49 = arith.addf %45, %48 : vector<4x256xf32>
    %cst_25 = arith.constant 0.000000e+00 : f32
    %50 = vector.broadcast %cst_25 : f32 to vector<4x256xf32>
    %51 = arith.maximumf %49, %50 : vector<4x256xf32>
    %c17_i32_26 = arith.constant 17 : i32
    %52 = tpu.dynamic_rotate %51 by %c17_i32_26 dim 1 : vector<4x256xf32>, i32 -> vector<4x256xf32>
    %c0_27 = arith.constant 0 : index
    %c0_28 = arith.constant 0 : index
    %c0_29 = arith.constant 0 : index
    %53 = vector.load %arg4[%c0_27, %c0_28, %c0_29] : memref<9x1x256xf32, #tpu.memory_space<vmem>>, vector<1x1x256xf32>
    %54 = vector.shape_cast %53 : vector<1x1x256xf32> to vector<1x256xf32>
    %55 = vector.broadcast %54 : vector<1x256xf32> to vector<4x256xf32>
    %56 = arith.mulf %52, %55 : vector<4x256xf32>
    %c16_i32_30 = arith.constant 16 : i32
    %57 = tpu.dynamic_rotate %51 by %c16_i32_30 dim 1 : vector<4x256xf32>, i32 -> vector<4x256xf32>
    %c1_31 = arith.constant 1 : index
    %c0_32 = arith.constant 0 : index
    %c0_33 = arith.constant 0 : index
    %58 = vector.load %arg4[%c1_31, %c0_32, %c0_33] : memref<9x1x256xf32, #tpu.memory_space<vmem>>, vector<1x1x256xf32>
    %59 = vector.shape_cast %58 : vector<1x1x256xf32> to vector<1x256xf32>
    %60 = vector.broadcast %59 : vector<1x256xf32> to vector<4x256xf32>
    %61 = arith.mulf %57, %60 : vector<4x256xf32>
    %c15_i32_34 = arith.constant 15 : i32
    %62 = tpu.dynamic_rotate %51 by %c15_i32_34 dim 1 : vector<4x256xf32>, i32 -> vector<4x256xf32>
    %c2_35 = arith.constant 2 : index
    %c0_36 = arith.constant 0 : index
    %c0_37 = arith.constant 0 : index
    %63 = vector.load %arg4[%c2_35, %c0_36, %c0_37] : memref<9x1x256xf32, #tpu.memory_space<vmem>>, vector<1x1x256xf32>
    %64 = vector.shape_cast %63 : vector<1x1x256xf32> to vector<1x256xf32>
    %65 = vector.broadcast %64 : vector<1x256xf32> to vector<4x256xf32>
    %66 = arith.mulf %62, %65 : vector<4x256xf32>
    %c1_i32_38 = arith.constant 1 : i32
    %67 = tpu.dynamic_rotate %51 by %c1_i32_38 dim 1 : vector<4x256xf32>, i32 -> vector<4x256xf32>
    %c3_39 = arith.constant 3 : index
    %c0_40 = arith.constant 0 : index
    %c0_41 = arith.constant 0 : index
    %68 = vector.load %arg4[%c3_39, %c0_40, %c0_41] : memref<9x1x256xf32, #tpu.memory_space<vmem>>, vector<1x1x256xf32>
    %69 = vector.shape_cast %68 : vector<1x1x256xf32> to vector<1x256xf32>
    %70 = vector.broadcast %69 : vector<1x256xf32> to vector<4x256xf32>
    %71 = arith.mulf %67, %70 : vector<4x256xf32>
    %c255_i32_42 = arith.constant 255 : i32
    %72 = tpu.dynamic_rotate %51 by %c255_i32_42 dim 1 : vector<4x256xf32>, i32 -> vector<4x256xf32>
    %c5_43 = arith.constant 5 : index
    %c0_44 = arith.constant 0 : index
    %c0_45 = arith.constant 0 : index
    %73 = vector.load %arg4[%c5_43, %c0_44, %c0_45] : memref<9x1x256xf32, #tpu.memory_space<vmem>>, vector<1x1x256xf32>
    %74 = vector.shape_cast %73 : vector<1x1x256xf32> to vector<1x256xf32>
    %75 = vector.broadcast %74 : vector<1x256xf32> to vector<4x256xf32>
    %76 = arith.mulf %72, %75 : vector<4x256xf32>
    %c241_i32_46 = arith.constant 241 : i32
    %77 = tpu.dynamic_rotate %51 by %c241_i32_46 dim 1 : vector<4x256xf32>, i32 -> vector<4x256xf32>
    %c6_47 = arith.constant 6 : index
    %c0_48 = arith.constant 0 : index
    %c0_49 = arith.constant 0 : index
    %78 = vector.load %arg4[%c6_47, %c0_48, %c0_49] : memref<9x1x256xf32, #tpu.memory_space<vmem>>, vector<1x1x256xf32>
    %79 = vector.shape_cast %78 : vector<1x1x256xf32> to vector<1x256xf32>
    %80 = vector.broadcast %79 : vector<1x256xf32> to vector<4x256xf32>
    %81 = arith.mulf %77, %80 : vector<4x256xf32>
    %c240_i32_50 = arith.constant 240 : i32
    %82 = tpu.dynamic_rotate %51 by %c240_i32_50 dim 1 : vector<4x256xf32>, i32 -> vector<4x256xf32>
    %c7_51 = arith.constant 7 : index
    %c0_52 = arith.constant 0 : index
    %c0_53 = arith.constant 0 : index
    %83 = vector.load %arg4[%c7_51, %c0_52, %c0_53] : memref<9x1x256xf32, #tpu.memory_space<vmem>>, vector<1x1x256xf32>
    %84 = vector.shape_cast %83 : vector<1x1x256xf32> to vector<1x256xf32>
    %85 = vector.broadcast %84 : vector<1x256xf32> to vector<4x256xf32>
    %86 = arith.mulf %82, %85 : vector<4x256xf32>
    %c239_i32_54 = arith.constant 239 : i32
    %87 = tpu.dynamic_rotate %51 by %c239_i32_54 dim 1 : vector<4x256xf32>, i32 -> vector<4x256xf32>
    %c8_55 = arith.constant 8 : index
    %c0_56 = arith.constant 0 : index
    %c0_57 = arith.constant 0 : index
    %88 = vector.load %arg4[%c8_55, %c0_56, %c0_57] : memref<9x1x256xf32, #tpu.memory_space<vmem>>, vector<1x1x256xf32>
    %89 = vector.shape_cast %88 : vector<1x1x256xf32> to vector<1x256xf32>
    %90 = vector.broadcast %89 : vector<1x256xf32> to vector<4x256xf32>
    %91 = arith.mulf %87, %90 : vector<4x256xf32>
    %92 = tpu.concatenate %56, %61, %66, %71, %51, %76, %81, %86, %91 in 0 : vector<4x256xf32>, vector<4x256xf32>, vector<4x256xf32>, vector<4x256xf32>, vector<4x256xf32>, vector<4x256xf32>, vector<4x256xf32>, vector<4x256xf32>, vector<4x256xf32> -> vector<36x256xf32>
    %c1_58 = arith.constant 1 : index
    %c0_59 = arith.constant 0 : index
    %c0_60 = arith.constant 0 : index
    %93 = vector.load %arg2[%c1_58, %c0_59, %c0_60] : memref<4x4x36xf32, #tpu.memory_space<vmem>>, vector<1x4x36xf32>
    %94 = vector.shape_cast %93 : vector<1x4x36xf32> to vector<4x36xf32>
    %cst_61 = arith.constant dense<0.000000e+00> : vector<4x256xf32>
    %95 = tpu.matmul %94, %92, %cst_61 {dimension_numbers = #tpu.dot_dimension_numbers<[1], [0], [0], [1], [0, 0, 1, 1], [], []>} : vector<4x36xf32>, vector<36x256xf32>, vector<4x256xf32> -> vector<4x256xf32>
    %c1_62 = arith.constant 1 : index
    %c0_63 = arith.constant 0 : index
    %c0_64 = arith.constant 0 : index
    %96 = vector.load %arg3[%c1_62, %c0_63, %c0_64] : memref<4x4x1xf32, #tpu.memory_space<vmem>>, vector<1x4x1xf32>
    %97 = vector.shape_cast %96 : vector<1x4x1xf32> to vector<4x1xf32>
    %98 = vector.broadcast %97 : vector<4x1xf32> to vector<4x256xf32>
    %99 = arith.addf %95, %98 : vector<4x256xf32>
    %c17_i32_65 = arith.constant 17 : i32
    %100 = tpu.dynamic_rotate %99 by %c17_i32_65 dim 1 : vector<4x256xf32>, i32 -> vector<4x256xf32>
    %c0_66 = arith.constant 0 : index
    %c0_67 = arith.constant 0 : index
    %c0_68 = arith.constant 0 : index
    %101 = vector.load %arg4[%c0_66, %c0_67, %c0_68] : memref<9x1x256xf32, #tpu.memory_space<vmem>>, vector<1x1x256xf32>
    %102 = vector.shape_cast %101 : vector<1x1x256xf32> to vector<1x256xf32>
    %103 = vector.broadcast %102 : vector<1x256xf32> to vector<4x256xf32>
    %104 = arith.mulf %100, %103 : vector<4x256xf32>
    %c16_i32_69 = arith.constant 16 : i32
    %105 = tpu.dynamic_rotate %99 by %c16_i32_69 dim 1 : vector<4x256xf32>, i32 -> vector<4x256xf32>
    %c1_70 = arith.constant 1 : index
    %c0_71 = arith.constant 0 : index
    %c0_72 = arith.constant 0 : index
    %106 = vector.load %arg4[%c1_70, %c0_71, %c0_72] : memref<9x1x256xf32, #tpu.memory_space<vmem>>, vector<1x1x256xf32>
    %107 = vector.shape_cast %106 : vector<1x1x256xf32> to vector<1x256xf32>
    %108 = vector.broadcast %107 : vector<1x256xf32> to vector<4x256xf32>
    %109 = arith.mulf %105, %108 : vector<4x256xf32>
    %c15_i32_73 = arith.constant 15 : i32
    %110 = tpu.dynamic_rotate %99 by %c15_i32_73 dim 1 : vector<4x256xf32>, i32 -> vector<4x256xf32>
    %c2_74 = arith.constant 2 : index
    %c0_75 = arith.constant 0 : index
    %c0_76 = arith.constant 0 : index
    %111 = vector.load %arg4[%c2_74, %c0_75, %c0_76] : memref<9x1x256xf32, #tpu.memory_space<vmem>>, vector<1x1x256xf32>
    %112 = vector.shape_cast %111 : vector<1x1x256xf32> to vector<1x256xf32>
    %113 = vector.broadcast %112 : vector<1x256xf32> to vector<4x256xf32>
    %114 = arith.mulf %110, %113 : vector<4x256xf32>
    %c1_i32_77 = arith.constant 1 : i32
    %115 = tpu.dynamic_rotate %99 by %c1_i32_77 dim 1 : vector<4x256xf32>, i32 -> vector<4x256xf32>
    %c3_78 = arith.constant 3 : index
    %c0_79 = arith.constant 0 : index
    %c0_80 = arith.constant 0 : index
    %116 = vector.load %arg4[%c3_78, %c0_79, %c0_80] : memref<9x1x256xf32, #tpu.memory_space<vmem>>, vector<1x1x256xf32>
    %117 = vector.shape_cast %116 : vector<1x1x256xf32> to vector<1x256xf32>
    %118 = vector.broadcast %117 : vector<1x256xf32> to vector<4x256xf32>
    %119 = arith.mulf %115, %118 : vector<4x256xf32>
    %c255_i32_81 = arith.constant 255 : i32
    %120 = tpu.dynamic_rotate %99 by %c255_i32_81 dim 1 : vector<4x256xf32>, i32 -> vector<4x256xf32>
    %c5_82 = arith.constant 5 : index
    %c0_83 = arith.constant 0 : index
    %c0_84 = arith.constant 0 : index
    %121 = vector.load %arg4[%c5_82, %c0_83, %c0_84] : memref<9x1x256xf32, #tpu.memory_space<vmem>>, vector<1x1x256xf32>
    %122 = vector.shape_cast %121 : vector<1x1x256xf32> to vector<1x256xf32>
    %123 = vector.broadcast %122 : vector<1x256xf32> to vector<4x256xf32>
    %124 = arith.mulf %120, %123 : vector<4x256xf32>
    %c241_i32_85 = arith.constant 241 : i32
    %125 = tpu.dynamic_rotate %99 by %c241_i32_85 dim 1 : vector<4x256xf32>, i32 -> vector<4x256xf32>
    %c6_86 = arith.constant 6 : index
    %c0_87 = arith.constant 0 : index
    %c0_88 = arith.constant 0 : index
    %126 = vector.load %arg4[%c6_86, %c0_87, %c0_88] : memref<9x1x256xf32, #tpu.memory_space<vmem>>, vector<1x1x256xf32>
    %127 = vector.shape_cast %126 : vector<1x1x256xf32> to vector<1x256xf32>
    %128 = vector.broadcast %127 : vector<1x256xf32> to vector<4x256xf32>
    %129 = arith.mulf %125, %128 : vector<4x256xf32>
    %c240_i32_89 = arith.constant 240 : i32
    %130 = tpu.dynamic_rotate %99 by %c240_i32_89 dim 1 : vector<4x256xf32>, i32 -> vector<4x256xf32>
    %c7_90 = arith.constant 7 : index
    %c0_91 = arith.constant 0 : index
    %c0_92 = arith.constant 0 : index
    %131 = vector.load %arg4[%c7_90, %c0_91, %c0_92] : memref<9x1x256xf32, #tpu.memory_space<vmem>>, vector<1x1x256xf32>
    %132 = vector.shape_cast %131 : vector<1x1x256xf32> to vector<1x256xf32>
    %133 = vector.broadcast %132 : vector<1x256xf32> to vector<4x256xf32>
    %134 = arith.mulf %130, %133 : vector<4x256xf32>
    %c239_i32_93 = arith.constant 239 : i32
    %135 = tpu.dynamic_rotate %99 by %c239_i32_93 dim 1 : vector<4x256xf32>, i32 -> vector<4x256xf32>
    %c8_94 = arith.constant 8 : index
    %c0_95 = arith.constant 0 : index
    %c0_96 = arith.constant 0 : index
    %136 = vector.load %arg4[%c8_94, %c0_95, %c0_96] : memref<9x1x256xf32, #tpu.memory_space<vmem>>, vector<1x1x256xf32>
    %137 = vector.shape_cast %136 : vector<1x1x256xf32> to vector<1x256xf32>
    %138 = vector.broadcast %137 : vector<1x256xf32> to vector<4x256xf32>
    %139 = arith.mulf %135, %138 : vector<4x256xf32>
    %140 = tpu.concatenate %104, %109, %114, %119, %99, %124, %129, %134, %139 in 0 : vector<4x256xf32>, vector<4x256xf32>, vector<4x256xf32>, vector<4x256xf32>, vector<4x256xf32>, vector<4x256xf32>, vector<4x256xf32>, vector<4x256xf32>, vector<4x256xf32> -> vector<36x256xf32>
    %c2_97 = arith.constant 2 : index
    %c0_98 = arith.constant 0 : index
    %c0_99 = arith.constant 0 : index
    %141 = vector.load %arg2[%c2_97, %c0_98, %c0_99] : memref<4x4x36xf32, #tpu.memory_space<vmem>>, vector<1x4x36xf32>
    %142 = vector.shape_cast %141 : vector<1x4x36xf32> to vector<4x36xf32>
    %cst_100 = arith.constant dense<0.000000e+00> : vector<4x256xf32>
    %143 = tpu.matmul %142, %140, %cst_100 {dimension_numbers = #tpu.dot_dimension_numbers<[1], [0], [0], [1], [0, 0, 1, 1], [], []>} : vector<4x36xf32>, vector<36x256xf32>, vector<4x256xf32> -> vector<4x256xf32>
    %c2_101 = arith.constant 2 : index
    %c0_102 = arith.constant 0 : index
    %c0_103 = arith.constant 0 : index
    %144 = vector.load %arg3[%c2_101, %c0_102, %c0_103] : memref<4x4x1xf32, #tpu.memory_space<vmem>>, vector<1x4x1xf32>
    %145 = vector.shape_cast %144 : vector<1x4x1xf32> to vector<4x1xf32>
    %146 = vector.broadcast %145 : vector<4x1xf32> to vector<4x256xf32>
    %147 = arith.addf %143, %146 : vector<4x256xf32>
    %c17_i32_104 = arith.constant 17 : i32
    %148 = tpu.dynamic_rotate %147 by %c17_i32_104 dim 1 : vector<4x256xf32>, i32 -> vector<4x256xf32>
    %c0_105 = arith.constant 0 : index
    %c0_106 = arith.constant 0 : index
    %c0_107 = arith.constant 0 : index
    %149 = vector.load %arg4[%c0_105, %c0_106, %c0_107] : memref<9x1x256xf32, #tpu.memory_space<vmem>>, vector<1x1x256xf32>
    %150 = vector.shape_cast %149 : vector<1x1x256xf32> to vector<1x256xf32>
    %151 = vector.broadcast %150 : vector<1x256xf32> to vector<4x256xf32>
    %152 = arith.mulf %148, %151 : vector<4x256xf32>
    %c16_i32_108 = arith.constant 16 : i32
    %153 = tpu.dynamic_rotate %147 by %c16_i32_108 dim 1 : vector<4x256xf32>, i32 -> vector<4x256xf32>
    %c1_109 = arith.constant 1 : index
    %c0_110 = arith.constant 0 : index
    %c0_111 = arith.constant 0 : index
    %154 = vector.load %arg4[%c1_109, %c0_110, %c0_111] : memref<9x1x256xf32, #tpu.memory_space<vmem>>, vector<1x1x256xf32>
    %155 = vector.shape_cast %154 : vector<1x1x256xf32> to vector<1x256xf32>
    %156 = vector.broadcast %155 : vector<1x256xf32> to vector<4x256xf32>
    %157 = arith.mulf %153, %156 : vector<4x256xf32>
    %c15_i32_112 = arith.constant 15 : i32
    %158 = tpu.dynamic_rotate %147 by %c15_i32_112 dim 1 : vector<4x256xf32>, i32 -> vector<4x256xf32>
    %c2_113 = arith.constant 2 : index
    %c0_114 = arith.constant 0 : index
    %c0_115 = arith.constant 0 : index
    %159 = vector.load %arg4[%c2_113, %c0_114, %c0_115] : memref<9x1x256xf32, #tpu.memory_space<vmem>>, vector<1x1x256xf32>
    %160 = vector.shape_cast %159 : vector<1x1x256xf32> to vector<1x256xf32>
    %161 = vector.broadcast %160 : vector<1x256xf32> to vector<4x256xf32>
    %162 = arith.mulf %158, %161 : vector<4x256xf32>
    %c1_i32_116 = arith.constant 1 : i32
    %163 = tpu.dynamic_rotate %147 by %c1_i32_116 dim 1 : vector<4x256xf32>, i32 -> vector<4x256xf32>
    %c3_117 = arith.constant 3 : index
    %c0_118 = arith.constant 0 : index
    %c0_119 = arith.constant 0 : index
    %164 = vector.load %arg4[%c3_117, %c0_118, %c0_119] : memref<9x1x256xf32, #tpu.memory_space<vmem>>, vector<1x1x256xf32>
    %165 = vector.shape_cast %164 : vector<1x1x256xf32> to vector<1x256xf32>
    %166 = vector.broadcast %165 : vector<1x256xf32> to vector<4x256xf32>
    %167 = arith.mulf %163, %166 : vector<4x256xf32>
    %c255_i32_120 = arith.constant 255 : i32
    %168 = tpu.dynamic_rotate %147 by %c255_i32_120 dim 1 : vector<4x256xf32>, i32 -> vector<4x256xf32>
    %c5_121 = arith.constant 5 : index
    %c0_122 = arith.constant 0 : index
    %c0_123 = arith.constant 0 : index
    %169 = vector.load %arg4[%c5_121, %c0_122, %c0_123] : memref<9x1x256xf32, #tpu.memory_space<vmem>>, vector<1x1x256xf32>
    %170 = vector.shape_cast %169 : vector<1x1x256xf32> to vector<1x256xf32>
    %171 = vector.broadcast %170 : vector<1x256xf32> to vector<4x256xf32>
    %172 = arith.mulf %168, %171 : vector<4x256xf32>
    %c241_i32_124 = arith.constant 241 : i32
    %173 = tpu.dynamic_rotate %147 by %c241_i32_124 dim 1 : vector<4x256xf32>, i32 -> vector<4x256xf32>
    %c6_125 = arith.constant 6 : index
    %c0_126 = arith.constant 0 : index
    %c0_127 = arith.constant 0 : index
    %174 = vector.load %arg4[%c6_125, %c0_126, %c0_127] : memref<9x1x256xf32, #tpu.memory_space<vmem>>, vector<1x1x256xf32>
    %175 = vector.shape_cast %174 : vector<1x1x256xf32> to vector<1x256xf32>
    %176 = vector.broadcast %175 : vector<1x256xf32> to vector<4x256xf32>
    %177 = arith.mulf %173, %176 : vector<4x256xf32>
    %c240_i32_128 = arith.constant 240 : i32
    %178 = tpu.dynamic_rotate %147 by %c240_i32_128 dim 1 : vector<4x256xf32>, i32 -> vector<4x256xf32>
    %c7_129 = arith.constant 7 : index
    %c0_130 = arith.constant 0 : index
    %c0_131 = arith.constant 0 : index
    %179 = vector.load %arg4[%c7_129, %c0_130, %c0_131] : memref<9x1x256xf32, #tpu.memory_space<vmem>>, vector<1x1x256xf32>
    %180 = vector.shape_cast %179 : vector<1x1x256xf32> to vector<1x256xf32>
    %181 = vector.broadcast %180 : vector<1x256xf32> to vector<4x256xf32>
    %182 = arith.mulf %178, %181 : vector<4x256xf32>
    %c239_i32_132 = arith.constant 239 : i32
    %183 = tpu.dynamic_rotate %147 by %c239_i32_132 dim 1 : vector<4x256xf32>, i32 -> vector<4x256xf32>
    %c8_133 = arith.constant 8 : index
    %c0_134 = arith.constant 0 : index
    %c0_135 = arith.constant 0 : index
    %184 = vector.load %arg4[%c8_133, %c0_134, %c0_135] : memref<9x1x256xf32, #tpu.memory_space<vmem>>, vector<1x1x256xf32>
    %185 = vector.shape_cast %184 : vector<1x1x256xf32> to vector<1x256xf32>
    %186 = vector.broadcast %185 : vector<1x256xf32> to vector<4x256xf32>
    %187 = arith.mulf %183, %186 : vector<4x256xf32>
    %188 = tpu.concatenate %152, %157, %162, %167, %147, %172, %177, %182, %187 in 0 : vector<4x256xf32>, vector<4x256xf32>, vector<4x256xf32>, vector<4x256xf32>, vector<4x256xf32>, vector<4x256xf32>, vector<4x256xf32>, vector<4x256xf32>, vector<4x256xf32> -> vector<36x256xf32>
    %c3_136 = arith.constant 3 : index
    %c0_137 = arith.constant 0 : index
    %c0_138 = arith.constant 0 : index
    %189 = vector.load %arg2[%c3_136, %c0_137, %c0_138] : memref<4x4x36xf32, #tpu.memory_space<vmem>>, vector<1x4x36xf32>
    %190 = vector.shape_cast %189 : vector<1x4x36xf32> to vector<4x36xf32>
    %cst_139 = arith.constant dense<0.000000e+00> : vector<4x256xf32>
    %191 = tpu.matmul %190, %188, %cst_139 {dimension_numbers = #tpu.dot_dimension_numbers<[1], [0], [0], [1], [0, 0, 1, 1], [], []>} : vector<4x36xf32>, vector<36x256xf32>, vector<4x256xf32> -> vector<4x256xf32>
    %c3_140 = arith.constant 3 : index
    %c0_141 = arith.constant 0 : index
    %c0_142 = arith.constant 0 : index
    %192 = vector.load %arg3[%c3_140, %c0_141, %c0_142] : memref<4x4x1xf32, #tpu.memory_space<vmem>>, vector<1x4x1xf32>
    %193 = vector.shape_cast %192 : vector<1x4x1xf32> to vector<4x1xf32>
    %194 = vector.broadcast %193 : vector<4x1xf32> to vector<4x256xf32>
    %195 = arith.addf %191, %194 : vector<4x256xf32>
    %c0_143 = arith.constant 0 : index
    %c0_144 = arith.constant 0 : index
    %c0_145 = arith.constant 0 : index
    %196 = vector.load %arg5[%c0_143, %c0_144, %c0_145] : memref<1x4x256xf32, #tpu.memory_space<vmem>>, vector<1x4x256xf32>
    %197 = vector.shape_cast %196 : vector<1x4x256xf32> to vector<4x256xf32>
    %198 = vector.shape_cast %195 : vector<4x256xf32> to vector<1x4x256xf32>
    tpu.vector_store %arg5[%c0_143, %c0_144, %c0_145], %198 {strides = array<i32>} : memref<1x4x256xf32, #tpu.memory_space<vmem>>, vector<1x4x256xf32>,
    return
  }
  func.func @transform_0(%arg0: i32) -> (i32, i32, i32) {
    %c0_i32 = arith.constant 0 : i32
    %c0_i32_0 = arith.constant 0 : i32
    %c0_i32_1 = arith.constant 0 : i32
    return %arg0, %c0_i32, %c0_i32_0 : i32, i32, i32
  }
  func.func @transform_1(%arg0: i32) -> (i32, i32, i32) {
    %c0_i32 = arith.constant 0 : i32
    %c0_i32_0 = arith.constant 0 : i32
    %c0_i32_1 = arith.constant 0 : i32
    %c0_i32_2 = arith.constant 0 : i32
    return %c0_i32, %c0_i32_0, %c0_i32_1 : i32, i32, i32
  }
  func.func @transform_2(%arg0: i32) -> (i32, i32, i32) {
    %c0_i32 = arith.constant 0 : i32
    %c0_i32_0 = arith.constant 0 : i32
    %c0_i32_1 = arith.constant 0 : i32
    %c0_i32_2 = arith.constant 0 : i32
    return %c0_i32, %c0_i32_0, %c0_i32_1 : i32, i32, i32
  }
  func.func @transform_3(%arg0: i32) -> (i32, i32, i32) {
    %c0_i32 = arith.constant 0 : i32
    %c0_i32_0 = arith.constant 0 : i32
    %c0_i32_1 = arith.constant 0 : i32
    %c0_i32_2 = arith.constant 0 : i32
    return %c0_i32, %c0_i32_0, %c0_i32_1 : i32, i32, i32
  }
  func.func @transform_4(%arg0: i32) -> (i32, i32, i32) {
    %c0_i32 = arith.constant 0 : i32
    %c0_i32_0 = arith.constant 0 : i32
    %c0_i32_1 = arith.constant 0 : i32
    return %arg0, %c0_i32, %c0_i32_0 : i32, i32, i32
  }
}

</mosaic_0001>

<llo_original>
// kernel: tpu_custom_call.1
$region0: #{tpu_custom_call.1}
  #allocation0 [shape = 'u32[]', space=smem, size = 0x4, offset = 0x4, fixed_abs, tag = 'smem constant byte address 0x4 - core index']
  #allocation1 [shape = 'u32[144,128]{1,0:T(1,128)}', space=vmem, size = 0x12000, scoped, tag = 'internal scratch']
  %s0 = inlined_call_operand.hbm [shape: f32[2,4,256], index: 0, kind: input, shape index: {}]
  %s1 = inlined_call_operand.hbm [shape: f32[4,4,36], index: 1, kind: input, shape index: {}]
  %s2 = inlined_call_operand.vmem [shape: f32[4,4,1], index: 2, kind: input, shape index: {}]
  %s3 = inlined_call_operand.vmem [shape: f32[9,1,256], index: 3, kind: input, shape index: {}]
  %s4 = inlined_call_operand.hbm [shape: f32[2,4,256], index: 4, kind: output, shape index: {}]
  %s5 = sld [smem:[#allocation0]]
  $region57: #{tpu_custom_call.1} parent=0
    _
  %s7 = ssub.s32 1, %s5
  %s8 = scalar_select 0, %s7, %s5
  $region1: #{tpu_custom_call.1} parent=0
    #allocation2 [shape = 'u8[8192]{0}', space=vmem, size = 0x2000, scoped, tag = 'input window, operand 0']
    #allocation3 [shape = 's32[2]{0}', space=sflag, size = 0x8, scoped, tag = 'scoped memory for tpu_custom_call.1']
    #allocation4 [shape = 's32[2]{0}', space=sflag, size = 0x8, scoped, tag = 'scoped memory for tpu_custom_call.1']
    #allocation5 [shape = 'u8[8192]{0}', space=vmem, size = 0x2000, scoped, tag = 'input window, operand 1, single buffered']
    #allocation6 [shape = 's32[1]{0}', space=sflag, size = 0x4, scoped, tag = 'scoped memory for tpu_custom_call.1']
    #allocation7 [shape = 'u8[8192]{0}', space=vmem, size = 0x2000, scoped, tag = 'output window, operand 0']
    %9 = vsyncpa [#allocation3], 0
    %s10 = scalar_lea.sflag [#allocation3], 1
    %11 = vsyncpa %s10, 0
    %12 = vsyncpa [#allocation6], 0
    %13 = vsyncpa [#allocation4], 0
    %s14 = scalar_lea.sflag [#allocation4], 1
    %15 = vsyncpa %s14, 0
    loop: start=0, step=1, limit=4
    $region2: #{tpu_custom_call.1} parent=1 // loop_pre_header
      _
    $region3: #{tpu_custom_call.1} parent=1 // loop_header
      %s17 = sphi 0, %s21
      %p18 = scmp.ge.s32.totalorder %s17, 4
      %s27 = sphi 0, %s29
      %s30 = sphi 0, %s27
      %s31 = sphi 0, %s30
      %s47 = sphi 0, %s31
      %s51 = sphi 0, %s51
      %s53 = sphi 0, %s51
      %s54 = sphi 0, %s53
      %s68 = sphi 0, %s54
      %s72 = sphi 0, %s72
      %s74 = sphi 0, %s72
      %s75 = sphi 0, %s74
      %s89 = sphi 0, %s75
      %s93 = sphi 0, %s93
      %s95 = sphi 0, %s93
      %s96 = sphi 0, %s95
      %s110 = sphi 0, %s96
      %s116 = sphi 0, %s118
      %s119 = sphi 0, %s116
      %s120 = sphi 0, %s119
      %s136 = sphi 0, %s120
    $region4: #{tpu_custom_call.1} parent=1 // loop_header_branch
      %20 = sbr.rel (%p18) target = $region8
    $region5: #{tpu_custom_call.1} parent=1 // loop_body
      %s22 = ssub.s32 %s17, 1
      %s23 = ssub.s32 %s17, 2
      %s24 = sadd.s32 %s17, 1
      %s25 = ssub.s32 %s17, %s24
      %p26 = scmp.eq.s32.totalorder %s25, 0
      %s28 = sadd.s32 %s27, 1
      %s29 = scalar_select %p26, %s27, %s28
      %p32 = pneg %p26
      %p33 = scmp.eq.s32.totalorder %s17, 1
      %p34 = por %p32, %p33
      %p35 = scmp.ne.s32.totalorder %s27, %s30
      %p36 = scmp.eq.s32.totalorder %s17, 0
      %p37 = por %p35, %p36
      %p38 = scmp.ne.s32.totalorder %s27, %s30
      %p39 = scmp.eq.s32.totalorder %s22, 1
      %p40 = por %p38, %p39
      %p41 = scmp.ne.s32.totalorder %s30, %s31
      %p42 = scmp.eq.s32.totalorder %s22, 0
      %p43 = por %p41, %p42
      %p44 = scmp.ne.s32.totalorder %s30, %s31
      %p45 = scmp.eq.s32.totalorder %s23, 1
      %p46 = por %p44, %p45
      %p48 = scmp.ne.s32.totalorder %s31, %s47
      %p49 = scmp.eq.s32.totalorder %s23, 0
      %p50 = por %p48, %p49
      %s52 = sadd.s32 %s51, 1
      %p55 = scmp.eq.s32.totalorder %s17, 1
      %p56 = scmp.ne.s32.totalorder %s51, %s53
      %p57 = scmp.eq.s32.totalorder %s17, 0
      %p58 = por %p56, %p57
      %p59 = scmp.ne.s32.totalorder %s51, %s53
      %p60 = scmp.eq.s32.totalorder %s22, 1
      %p61 = por %p59, %p60
      %p62 = scmp.ne.s32.totalorder %s53, %s54
      %p63 = scmp.eq.s32.totalorder %s22, 0
      %p64 = por %p62, %p63
      %p65 = scmp.ne.s32.totalorder %s53, %s54
      %p66 = scmp.eq.s32.totalorder %s23, 1
      %p67 = por %p65, %p66
      %p69 = scmp.ne.s32.totalorder %s54, %s68
      %p70 = scmp.eq.s32.totalorder %s23, 0
      %p71 = por %p69, %p70
      %s73 = sadd.s32 %s72, 1
      %p76 = scmp.eq.s32.totalorder %s17, 1
      %p77 = scmp.ne.s32.totalorder %s72, %s74
      %p78 = scmp.eq.s32.totalorder %s17, 0
      %p79 = por %p77, %p78
      %p80 = scmp.ne.s32.totalorder %s72, %s74
      %p81 = scmp.eq.s32.totalorder %s22, 1
      %p82 = por %p80, %p81
      %p83 = scmp.ne.s32.totalorder %s74, %s75
      %p84 = scmp.eq.s32.totalorder %s22, 0
      %p85 = por %p83, %p84
      %p86 = scmp.ne.s32.totalorder %s74, %s75
      %p87 = scmp.eq.s32.totalorder %s23, 1
      %p88 = por %p86, %p87
      %p90 = scmp.ne.s32.totalorder %s75, %s89
      %p91 = scmp.eq.s32.totalorder %s23, 0
      %p92 = por %p90, %p91
      %s94 = sadd.s32 %s93, 1
      %p97 = scmp.eq.s32.totalorder %s17, 1
      %p98 = scmp.ne.s32.totalorder %s93, %s95
      %p99 = scmp.eq.s32.totalorder %s17, 0
      %p100 = por %p98, %p99
      %p101 = scmp.ne.s32.totalorder %s93, %s95
      %p102 = scmp.eq.s32.totalorder %s22, 1
      %p103 = por %p101, %p102
      %p104 = scmp.ne.s32.totalorder %s95, %s96
      %p105 = scmp.eq.s32.totalorder %s22, 0
      %p106 = por %p104, %p105
      %p107 = scmp.ne.s32.totalorder %s95, %s96
      %p108 = scmp.eq.s32.totalorder %s23, 1
      %p109 = por %p107, %p108
      %p111 = scmp.ne.s32.totalorder %s96, %s110
      %p112 = scmp.eq.s32.totalorder %s23, 0
      %p113 = por %p111, %p112
      %s114 = ssub.s32 %s17, %s24
      %p115 = scmp.eq.s32.totalorder %s114, 0
      %s117 = sadd.s32 %s116, 1
      %s118 = scalar_select %p115, %s116, %s117
      %p121 = pneg %p115
      %p122 = scmp.eq.s32.totalorder %s17, 1
      %p123 = por %p121, %p122
      %p124 = scmp.ne.s32.totalorder %s116, %s119
      %p125 = scmp.eq.s32.totalorder %s17, 0
      %p126 = por %p124, %p125
      %p127 = scmp.ne.s32.totalorder %s116, %s119
      %p128 = scmp.eq.s32.totalorder %s22, 1
      %p129 = por %p127, %p128
      %p130 = scmp.ne.s32.totalorder %s119, %s120
      %p131 = scmp.eq.s32.totalorder %s22, 0
      %p132 = por %p130, %p131
      %p133 = scmp.ne.s32.totalorder %s119, %s120
      %p134 = scmp.eq.s32.totalorder %s23, 1
      %p135 = por %p133, %p134
      %p137 = scmp.ne.s32.totalorder %s120, %s136
      %p138 = scmp.eq.s32.totalorder %s23, 0
      %p139 = por %p137, %p138
      %p140 = scmp.le.s32.totalorder 1, %s17
      %p141 = scmp.lt.s32.totalorder %s17, 3
      %p142 = pnand %p140, %p141
      %p143 = pneg %p142
      // Predicated region
      $region9: #{tpu_custom_call.1} parent=5 // pred_check
        _
      $region10: #{tpu_custom_call.1} parent=5 // pred_check_branch
        %145 = sbr.rel (%p142) target = $region12
      $region11: #{tpu_custom_call.1} parent=5 // pred_region
        %s146 = ssub.s32 %s17, 1
        // Predicated region
        $region13: #{tpu_custom_call.1} parent=11 // pred_check
          %p147 = pneg %p64
        $region14: #{tpu_custom_call.1} parent=11 // pred_check_branch
          %149 = sbr.rel (%p147) target = $region16
        $region15: #{tpu_custom_call.1} parent=11 // pred_region
          %s151 = ssub.s32 256, 256
          %152 = vsyncadd [#allocation6], %s151
          %s153 = sshll.u32 [#allocation5], 4
          %s154 = int_to_ptr.vmem [resolvable:$true] %s153
          %159 = dma.hbm_to_vmem [thread:$0]  %s1, 256, %s154, [#allocation6], 64, 64, 4
        $region16: #{tpu_custom_call.1} parent=11 // pred_fallthru
          _
        // Predicated region
        $region17: #{tpu_custom_call.1} parent=11 // pred_check
          %p160 = pneg %p85
        $region18: #{tpu_custom_call.1} parent=11 // pred_check_branch
          %162 = sbr.rel (%p160) target = $region20
        $region19: #{tpu_custom_call.1} parent=11 // pred_region
          _
        $region20: #{tpu_custom_call.1} parent=11 // pred_fallthru
          _
        // Predicated region
        $region21: #{tpu_custom_call.1} parent=11 // pred_check
          %p163 = pneg %p106
        $region22: #{tpu_custom_call.1} parent=11 // pred_check_branch
          %165 = sbr.rel (%p163) target = $region24
        $region23: #{tpu_custom_call.1} parent=11 // pred_region
          _
        $region24: #{tpu_custom_call.1} parent=11 // pred_fallthru
          _
      $region12: #{tpu_custom_call.1} parent=5 // pred_fallthru
        _
      %p166 = scmp.lt.s32.totalorder %s17, 2
      // Predicated region
      $region25: #{tpu_custom_call.1} parent=5 // pred_check
        %p167 = pneg %p166
      $region26: #{tpu_custom_call.1} parent=5 // pred_check_branch
        %169 = sbr.rel (%p167) target = $region28
      $region27: #{tpu_custom_call.1} parent=5 // pred_region
        // Predicated region
        $region29: #{tpu_custom_call.1} parent=27 // pred_check
          %p170 = pneg %p37
        $region30: #{tpu_custom_call.1} parent=27 // pred_check_branch
          %172 = sbr.rel (%p170) target = $region32
        $region31: #{tpu_custom_call.1} parent=27 // pred_region
          %s173 = sand.u32 %s27, 1
          %s174 = scalar_lea.sflag [#allocation3], %s173
          %s175 = sand.u32 %s27, 1
          %s176 = smul.addr %s175, 8
          %s177 = scalar_lea.vmem [#allocation2], %s176
          %s179 = ssub.s32 128, 128
          %180 = vsyncadd %s174, %s179
          %s181 = smul.addr %s17, 2
          %s182 = smul.addr %s181, 64
          %s183 = scalar_lea.hbm %s0, %s182
          %s185 = sshll.u32 %s177, 4
          %s186 = int_to_ptr.vmem [resolvable:$true] %s185
          %188 = dma.hbm_to_vmem [thread:$0]  %s183, 128, %s186, %s174
        $region32: #{tpu_custom_call.1} parent=27 // pred_fallthru
          _
      $region28: #{tpu_custom_call.1} parent=5 // pred_fallthru
        _
      %p189 = scmp.le.s32.totalorder 1, %s17
      %p190 = scmp.lt.s32.totalorder %s17, 3
      %p191 = pnand %p189, %p190
      %p192 = pneg %p191
      // Predicated region
      $region33: #{tpu_custom_call.1} parent=5 // pred_check
        _
      $region34: #{tpu_custom_call.1} parent=5 // pred_check_branch
        %194 = sbr.rel (%p191) target = $region36
      $region35: #{tpu_custom_call.1} parent=5 // pred_region
        %s195 = ssub.s32 %s17, 1
        %s196 = sand.u32 %s30, 1
        %s197 = scalar_lea.sflag [#allocation3], %s196
        %s198 = sand.u32 %s30, 1
        %s199 = smul.addr %s198, 8
        %s200 = scalar_lea.vmem [#allocation2], %s199
        // Predicated region
        $region37: #{tpu_custom_call.1} parent=35 // pred_check
          %p201 = pneg %p43
        $region38: #{tpu_custom_call.1} parent=35 // pred_check_branch
          %203 = sbr.rel (%p201) target = $region40
        $region39: #{tpu_custom_call.1} parent=35 // pred_region
          %204 = dma.done %s197, 128
        $region40: #{tpu_custom_call.1} parent=35 // pred_fallthru
          _
        // Predicated region
        $region41: #{tpu_custom_call.1} parent=35 // pred_check
          %p205 = pneg %p64
        $region42: #{tpu_custom_call.1} parent=35 // pred_check_branch
          %207 = sbr.rel (%p205) target = $region44
        $region43: #{tpu_custom_call.1} parent=35 // pred_region
          %208 = dma.done [#allocation6], 256
        $region44: #{tpu_custom_call.1} parent=35 // pred_fallthru
          _
        %s209 = sand.u32 %s30, 1
        %s210 = scalar_lea.sflag [#allocation3], %s209
        %s211 = sand.u32 %s30, 1
        %s212 = smul.addr %s211, 8
        %s213 = scalar_lea.vmem [#allocation2], %s212
        %p214 = pneg %p43
        %p215 = pneg %p40
        %p216 = pneg %p64
        %p217 = pneg %p61
        %p218 = pneg %p85
        %p219 = pneg %p82
        %p220 = pneg %p106
        %p221 = pneg %p103
        %p222 = pneg %p132
        %p223 = pneg %p129
        %s224 = sand.u32 %s119, 1
        %s225 = scalar_lea.sflag [#allocation4], %s224
        %s226 = sand.u32 %s119, 1
        %s227 = smul.addr %s226, 8
        %s228 = scalar_lea.vmem [#allocation7], %s227
        %v229 = vld [vmem:[%s200] sm:$0xff]
        %v231 = vcombine.high %v229, %v229
        %233 = vrot.lane.b32.xlu0 %v229, 17
        %v234 = vpop.permute.xlu0 %233
        %235 = vrot.lane.b32.xlu0 %v231, 17
        %v236 = vpop.permute.xlu0 %235
        %v237 = vlaneseq
        %v238 = vand.u32 %v237, 127
        %vm239 = vcmp.lt.s32.totalorder %v238, 17
        %v240 = vsel %vm239, %v234, %v236
        %v241 = vsel %vm239, %v236, %v234
        %v242 = vld [vmem:[%s3] sm:$0x3]
        %v244 = vlaneseq
        %v245 = vshrl.u32 %v244, 7
        %v246 = vsub.s32 0, %v245
        %v247 = vrot.slane %v242, %v246
        %v248 = vlaneseq
        %v249 = vshrl.u32 %v248, 7
        %v250 = vsub.s32 1, %v249
        %v251 = vrot.slane %v242, %v250
        %v254 = vmul.f32 %v241, %v247
        %v255 = vmul.f32 %v240, %v251
        %256 = vrot.lane.b32.xlu0 %v229, 16
        %v257 = vpop.permute.xlu0 %256
        %258 = vrot.lane.b32.xlu0 %v231, 16
        %v259 = vpop.permute.xlu0 %258
        %vm260 = vcmp.lt.s32.totalorder %v238, 16
        %v261 = vsel %vm260, %v257, %v259
        %v262 = vsel %vm260, %v259, %v257
        %s263 = scalar_lea.vmem %s3, 2
        %v264 = vld [vmem:[%s263] sm:$0x3]
        %v266 = vlaneseq
        %v267 = vshrl.u32 %v266, 7
        %v268 = vsub.s32 0, %v267
        %v269 = vrot.slane %v264, %v268
        %v270 = vlaneseq
        %v271 = vshrl.u32 %v270, 7
        %v272 = vsub.s32 1, %v271
        %v273 = vrot.slane %v264, %v272
        %v276 = vmul.f32 %v262, %v269
        %v277 = vmul.f32 %v261, %v273
        %278 = vrot.lane.b32.xlu0 %v229, 15
        %v279 = vpop.permute.xlu0 %278
        %280 = vrot.lane.b32.xlu0 %v231, 15
        %v281 = vpop.permute.xlu0 %280
        %vm282 = vcmp.lt.s32.totalorder %v238, 15
        %v283 = vsel %vm282, %v279, %v281
        %v284 = vsel %vm282, %v281, %v279
        %s285 = scalar_lea.vmem %s3, 4
        %v286 = vld [vmem:[%s285] sm:$0x3]
        %v288 = vlaneseq
        %v289 = vshrl.u32 %v288, 7
        %v290 = vsub.s32 0, %v289
        %v291 = vrot.slane %v286, %v290
        %v292 = vlaneseq
        %v293 = vshrl.u32 %v292, 7
        %v294 = vsub.s32 1, %v293
        %v295 = vrot.slane %v286, %v294
        %v298 = vmul.f32 %v284, %v291
        %v299 = vmul.f32 %v283, %v295
        %300 = vrot.lane.b32.xlu0 %v229, 1
        %v301 = vpop.permute.xlu0 %300
        %302 = vrot.lane.b32.xlu0 %v231, 1
        %v303 = vpop.permute.xlu0 %302
        %vm304 = vcmp.lt.s32.totalorder %v238, 1
        %v305 = vsel %vm304, %v301, %v303
        %v306 = vsel %vm304, %v303, %v301
        %s307 = scalar_lea.vmem %s3, 6
        %v308 = vld [vmem:[%s307] sm:$0x3]
        %v310 = vlaneseq
        %v311 = vshrl.u32 %v310, 7
        %v312 = vsub.s32 0, %v311
        %v313 = vrot.slane %v308, %v312
        %v314 = vlaneseq
        %v315 = vshrl.u32 %v314, 7
        %v316 = vsub.s32 1, %v315
        %v317 = vrot.slane %v308, %v316
        %v320 = vmul.f32 %v306, %v313
        %v321 = vmul.f32 %v305, %v317
        %322 = vrot.lane.b32.xlu0 %v229, 127
        %v323 = vpop.permute.xlu0 %322
        %324 = vrot.lane.b32.xlu0 %v231, 127
        %v325 = vpop.permute.xlu0 %324
        %vm326 = vcmp.lt.s32.totalorder %v238, 127
        %v327 = vsel %vm326, %v323, %v325
        %v328 = vsel %vm326, %v325, %v323
        %s329 = scalar_lea.vmem %s3, 10
        %v330 = vld [vmem:[%s329] sm:$0x3]
        %v332 = vlaneseq
        %v333 = vshrl.u32 %v332, 7
        %v334 = vsub.s32 0, %v333
        %v335 = vrot.slane %v330, %v334
        %v336 = vlaneseq
        %v337 = vshrl.u32 %v336, 7
        %v338 = vsub.s32 1, %v337
        %v339 = vrot.slane %v330, %v338
        %v342 = vmul.f32 %v327, %v335
        %v343 = vmul.f32 %v328, %v339
        %344 = vrot.lane.b32.xlu0 %v229, 113
        %v345 = vpop.permute.xlu0 %344
        %346 = vrot.lane.b32.xlu0 %v231, 113
        %v347 = vpop.permute.xlu0 %346
        %vm348 = vcmp.lt.s32.totalorder %v238, 113
        %v349 = vsel %vm348, %v345, %v347
        %v350 = vsel %vm348, %v347, %v345
        %s351 = scalar_lea.vmem %s3, 12
        %v352 = vld [vmem:[%s351] sm:$0x3]
        %v354 = vlaneseq
        %v355 = vshrl.u32 %v354, 7
        %v356 = vsub.s32 0, %v355
        %v357 = vrot.slane %v352, %v356
        %v358 = vlaneseq
        %v359 = vshrl.u32 %v358, 7
        %v360 = vsub.s32 1, %v359
        %v361 = vrot.slane %v352, %v360
        %v364 = vmul.f32 %v349, %v357
        %v365 = vmul.f32 %v350, %v361
        %366 = vrot.lane.b32.xlu0 %v229, 112
        %v367 = vpop.permute.xlu0 %366
        %368 = vrot.lane.b32.xlu0 %v231, 112
        %v369 = vpop.permute.xlu0 %368
        %vm370 = vcmp.lt.s32.totalorder %v238, 112
        %v371 = vsel %vm370, %v367, %v369
        %v372 = vsel %vm370, %v369, %v367
        %s373 = scalar_lea.vmem %s3, 14
        %v374 = vld [vmem:[%s373] sm:$0x3]
        %v376 = vlaneseq
        %v377 = vshrl.u32 %v376, 7
        %v378 = vsub.s32 0, %v377
        %v379 = vrot.slane %v374, %v378
        %v380 = vlaneseq
        %v381 = vshrl.u32 %v380, 7
        %v382 = vsub.s32 1, %v381
        %v383 = vrot.slane %v374, %v382
        %v386 = vmul.f32 %v371, %v379
        %v387 = vmul.f32 %v372, %v383
        %388 = vrot.lane.b32.xlu0 %v229, 111
        %v389 = vpop.permute.xlu0 %388
        %390 = vrot.lane.b32.xlu0 %v231, 111
        %v391 = vpop.permute.xlu0 %390
        %vm392 = vcmp.lt.s32.totalorder %v238, 111
        %v393 = vsel %vm392, %v389, %v391
        %v394 = vsel %vm392, %v391, %v389
        %s395 = scalar_lea.vmem %s3, 16
        %v396 = vld [vmem:[%s395] sm:$0x3]
        %v398 = vlaneseq
        %v399 = vshrl.u32 %v398, 7
        %v400 = vsub.s32 0, %v399
        %v401 = vrot.slane %v396, %v400
        %v402 = vlaneseq
        %v403 = vshrl.u32 %v402, 7
        %v404 = vsub.s32 1, %v403
        %v405 = vrot.slane %v396, %v404
        %v408 = vmul.f32 %v393, %v401
        %v409 = vmul.f32 %v394, %v405
        %v412 = vrot.slane %v276, 4
        %v413 = vrot.slane %v277, 4
        %v418 = vrot.slane %v320, 4
        %v419 = vrot.slane %v321, 4
        %v424 = vrot.slane %v342, 4
        %v425 = vrot.slane %v343, 4
        %v430 = vrot.slane %v386, 4
        %v431 = vrot.slane %v387, 4
        %vm434 = vcmask 1043456
        %v435 = vsel %vm434, %v254, %v412
        %v436 = vsel %vm434, %v255, %v413
        %v437 = vsel %vm434, %v298, %v418
        %v438 = vsel %vm434, %v299, %v419
        %v439 = vsel %vm434, %v229, %v424
        %v440 = vsel %vm434, %v231, %v425
        %v441 = vsel %vm434, %v364, %v430
        %v442 = vsel %vm434, %v365, %v431
        %v443 = vld [vmem:[#allocation5] sm:$0xf]
        %v444 = vld [vmem:[%s2] sm:$0xf]
        %446 = vset.pattern.permute.xlu0 0
        %447 = vperm.xlu0 %446, %v444
        %v448 = vpop.permute.xlu0 %447
        %vm450 = vcmask 293888
        %v452 = vsel %vm450, %v443, 0
        %v455 = vsel %vm434, %v408, 0
        %v458 = vsel %vm434, %v409, 0
        %460 = vmatprep.subr.mxu0 %v436
        %461 = vmatpush1.msra.mxu0 %v435
        %462 = vmatprep.subr.mxu0 %v438
        %463 = vmatpush1.msra.mxu0 %v437
        %464 = vmatprep.subr.mxu0 %v440
        %465 = vmatpush1.msra.mxu0 %v439
        %466 = vmatprep.subr.mxu0 %v442
        %467 = vmatpush1.msra.mxu0 %v441
        %468 = vmatprep.subr.mxu0 %v458
        %469 = vmatpush1.msra.mxu0 %v455
        %470 = vmatprep.subr.mxu0 0.0
        %471 = vmatpush1.msra.mxu0 0.0
        %472 = vmatprep.subr.mxu0 0.0
        %473 = vmatpush1.msra.mxu0 0.0
        %474 = vmatprep.subr.mxu0 0.0
        %475 = vmatpush1.msra.mxu0 0.0
        %476 = vmatprep.subr.mxu0 0.0
        %477 = vmatpush1.msra.mxu0 0.0
        %478 = vmatprep.subr.mxu0 0.0
        %479 = vmatpush1.msra.mxu0 0.0
        %480 = vmatprep.subr.mxu0 0.0
        %481 = vmatpush1.msra.mxu0 0.0
        %482 = vmatprep.subr.mxu0 0.0
        %483 = vmatpush1.msra.mxu0 0.0
        %484 = vmatprep.subr.mxu0 0.0
        %485 = vmatpush1.msra.mxu0 0.0
        %486 = vmatprep.subr.mxu0 0.0
        %487 = vmatpush1.msra.mxu0 0.0
        %488 = vmatprep.subr.mxu0 0.0
        %489 = vmatpush1.msra.mxu0 0.0
        %490 = vmatprep.subr.mxu0 0.0
        %491 = vmatpush1.msra.mxu0 0.0
        %492 = vmatprep.subr.mxu0 0.0
        %493 = vmatpush1.msra.mxu0 0.0
        %494 = vmatprep.subr.mxu0 0.0
        %495 = vmatpush1.msra.mxu0 0.0
        %496 = vmatprep.subr.mxu0 0.0
        %497 = vmatpush1.msra.mxu0 0.0
        %498 = vmatprep.subr.mxu0 0.0
        %499 = vmatpush1.msra.mxu0 0.0
        %500 = vmatprep.subr.mxu0 0.0
        %501 = vmatpush1.msra.mxu0 0.0
        %502 = vmatprep.subr.mxu0 0.0
        %503 = vmatpush1.msra.mxu0 0.0
        %504 = vmatprep.subr.mxu0 0.0
        %505 = vmatpush1.msra.mxu0 0.0
        %506 = vmatprep.subr.mxu0 0.0
        %507 = vmatpush1.msra.mxu0 0.0
        %508 = vmatprep.subr.mxu0 0.0
        %509 = vmatpush1.msra.mxu0 0.0
        %510 = vmatprep.subr.mxu0 0.0
        %511 = vmatpush1.msra.mxu0 0.0
        %512 = vmatprep.subr.mxu0 0.0
        %513 = vmatpush1.msra.mxu0 0.0
        %514 = vmatprep.subr.mxu0 0.0
        %515 = vmatpush1.msra.mxu0 0.0
        %516 = vmatprep.subr.mxu0 0.0
        %517 = vmatpush1.msra.mxu0 0.0
        %518 = vmatprep.subr.mxu0 0.0
        %519 = vmatpush1.msra.mxu0 0.0
        %520 = vmatprep.subr.mxu0 0.0
        %521 = vmatpush1.msra.mxu0 0.0
        %522 = vmatprep.subr.mxu0 0.0
        %523 = vmatpush1.msra.mxu0 0.0
        %524 = vmatprep.mubr.f32.mxu0 0.0
        %525 = vmatmul.mubr.f32.gmra.mrb[0].mxu0 %v452
        %v526 = vpop.f32.mrb[0].mxu0
        %v527 = vadd.f32 %v448, %v526
        %v528 = vpop.f32.mrb[0].mxu0
        %v529 = vadd.f32 %v448, %v528
        %530 = vdwg.mxu0
        %v531 = vmax.f32 %v527, 0.0
        %v532 = vmax.f32 %v529, 0.0
        %533 = vrot.lane.b32.xlu0 %v531, 17
        %v534 = vpop.permute.xlu0 %533
        %535 = vrot.lane.b32.xlu0 %v532, 17
        %v536 = vpop.permute.xlu0 %535
        %v537 = vsel %vm239, %v534, %v536
        %v538 = vsel %vm239, %v536, %v534
        %v539 = vmul.f32 %v538, %v247
        %v540 = vmul.f32 %v537, %v251
        %541 = vrot.lane.b32.xlu0 %v531, 16
        %v542 = vpop.permute.xlu0 %541
        %543 = vrot.lane.b32.xlu0 %v532, 16
        %v544 = vpop.permute.xlu0 %543
        %v545 = vsel %vm260, %v542, %v544
        %v546 = vsel %vm260, %v544, %v542
        %v547 = vmul.f32 %v546, %v269
        %v548 = vmul.f32 %v545, %v273
        %549 = vrot.lane.b32.xlu0 %v531, 15
        %v550 = vpop.permute.xlu0 %549
        %551 = vrot.lane.b32.xlu0 %v532, 15
        %v552 = vpop.permute.xlu0 %551
        %v553 = vsel %vm282, %v550, %v552
        %v554 = vsel %vm282, %v552, %v550
        %v555 = vmul.f32 %v554, %v291
        %v556 = vmul.f32 %v553, %v295
        %557 = vrot.lane.b32.xlu0 %v531, 1
        %v558 = vpop.permute.xlu0 %557
        %559 = vrot.lane.b32.xlu0 %v532, 1
        %v560 = vpop.permute.xlu0 %559
        %v561 = vsel %vm304, %v558, %v560
        %v562 = vsel %vm304, %v560, %v558
        %v563 = vmul.f32 %v562, %v313
        %v564 = vmul.f32 %v561, %v317
        %565 = vrot.lane.b32.xlu0 %v531, 127
        %v566 = vpop.permute.xlu0 %565
        %567 = vrot.lane.b32.xlu0 %v532, 127
        %v568 = vpop.permute.xlu0 %567
        %v569 = vsel %vm326, %v566, %v568
        %v570 = vsel %vm326, %v568, %v566
        %v571 = vmul.f32 %v569, %v335
        %v572 = vmul.f32 %v570, %v339
        %573 = vrot.lane.b32.xlu0 %v531, 113
        %v574 = vpop.permute.xlu0 %573
        %575 = vrot.lane.b32.xlu0 %v532, 113
        %v576 = vpop.permute.xlu0 %575
        %v577 = vsel %vm348, %v574, %v576
        %v578 = vsel %vm348, %v576, %v574
        %v579 = vmul.f32 %v577, %v357
        %v580 = vmul.f32 %v578, %v361
        %581 = vrot.lane.b32.xlu0 %v531, 112
        %v582 = vpop.permute.xlu0 %581
        %583 = vrot.lane.b32.xlu0 %v532, 112
        %v584 = vpop.permute.xlu0 %583
        %v585 = vsel %vm370, %v582, %v584
        %v586 = vsel %vm370, %v584, %v582
        %v587 = vmul.f32 %v585, %v379
        %v588 = vmul.f32 %v586, %v383
        %589 = vrot.lane.b32.xlu0 %v531, 111
        %v590 = vpop.permute.xlu0 %589
        %591 = vrot.lane.b32.xlu0 %v532, 111
        %v592 = vpop.permute.xlu0 %591
        %v593 = vsel %vm392, %v590, %v592
        %v594 = vsel %vm392, %v592, %v590
        %v595 = vmul.f32 %v593, %v401
        %v596 = vmul.f32 %v594, %v405
        %v599 = vrot.slane %v547, 4
        %v600 = vrot.slane %v548, 4
        %v605 = vrot.slane %v563, 4
        %v606 = vrot.slane %v564, 4
        %v611 = vrot.slane %v571, 4
        %v612 = vrot.slane %v572, 4
        %v617 = vrot.slane %v587, 4
        %v618 = vrot.slane %v588, 4
        %v621 = vsel %vm434, %v539, %v599
        %v622 = vsel %vm434, %v540, %v600
        %v623 = vsel %vm434, %v555, %v605
        %v624 = vsel %vm434, %v556, %v606
        %v625 = vsel %vm434, %v531, %v611
        %v626 = vsel %vm434, %v532, %v612
        %v627 = vsel %vm434, %v579, %v617
        %v628 = vsel %vm434, %v580, %v618
        %s629 = scalar_lea.vmem [#allocation5], 4
        %v630 = vld [vmem:[%s629] sm:$0xf]
        %s631 = scalar_lea.vmem %s2, 4
        %v632 = vld [vmem:[%s631] sm:$0xf]
        %634 = vset.pattern.permute.xlu0 0
        %635 = vperm.xlu0 %634, %v632
        %v636 = vpop.permute.xlu0 %635
        %v639 = vsel %vm450, %v630, 0
        %v642 = vsel %vm434, %v595, 0
        %v645 = vsel %vm434, %v596, 0
        %647 = vmatprep.subr.mxu0 %v622
        %648 = vmatpush1.msra.mxu0 %v621
        %649 = vmatprep.subr.mxu0 %v624
        %650 = vmatpush1.msra.mxu0 %v623
        %651 = vmatprep.subr.mxu0 %v626
        %652 = vmatpush1.msra.mxu0 %v625
        %653 = vmatprep.subr.mxu0 %v628
        %654 = vmatpush1.msra.mxu0 %v627
        %655 = vmatprep.subr.mxu0 %v645
        %656 = vmatpush1.msra.mxu0 %v642
        %657 = vmatprep.subr.mxu0 0.0
        %658 = vmatpush1.msra.mxu0 0.0
        %659 = vmatprep.subr.mxu0 0.0
        %660 = vmatpush1.msra.mxu0 0.0
        %661 = vmatprep.subr.mxu0 0.0
        %662 = vmatpush1.msra.mxu0 0.0
        %663 = vmatprep.subr.mxu0 0.0
        %664 = vmatpush1.msra.mxu0 0.0
        %665 = vmatprep.subr.mxu0 0.0
        %666 = vmatpush1.msra.mxu0 0.0
        %667 = vmatprep.subr.mxu0 0.0
        %668 = vmatpush1.msra.mxu0 0.0
        %669 = vmatprep.subr.mxu0 0.0
        %670 = vmatpush1.msra.mxu0 0.0
        %671 = vmatprep.subr.mxu0 0.0
        %672 = vmatpush1.msra.mxu0 0.0
        %673 = vmatprep.subr.mxu0 0.0
        %674 = vmatpush1.msra.mxu0 0.0
        %675 = vmatprep.subr.mxu0 0.0
        %676 = vmatpush1.msra.mxu0 0.0
        %677 = vmatprep.subr.mxu0 0.0
        %678 = vmatpush1.msra.mxu0 0.0
        %679 = vmatprep.subr.mxu0 0.0
        %680 = vmatpush1.msra.mxu0 0.0
        %681 = vmatprep.subr.mxu0 0.0
        %682 = vmatpush1.msra.mxu0 0.0
        %683 = vmatprep.subr.mxu0 0.0
        %684 = vmatpush1.msra.mxu0 0.0
        %685 = vmatprep.subr.mxu0 0.0
        %686 = vmatpush1.msra.mxu0 0.0
        %687 = vmatprep.subr.mxu0 0.0
        %688 = vmatpush1.msra.mxu0 0.0
        %689 = vmatprep.subr.mxu0 0.0
        %690 = vmatpush1.msra.mxu0 0.0
        %691 = vmatprep.subr.mxu0 0.0
        %692 = vmatpush1.msra.mxu0 0.0
        %693 = vmatprep.subr.mxu0 0.0
        %694 = vmatpush1.msra.mxu0 0.0
        %695 = vmatprep.subr.mxu0 0.0
        %696 = vmatpush1.msra.mxu0 0.0
        %697 = vmatprep.subr.mxu0 0.0
        %698 = vmatpush1.msra.mxu0 0.0
        %699 = vmatprep.subr.mxu0 0.0
        %700 = vmatpush1.msra.mxu0 0.0
        %701 = vmatprep.subr.mxu0 0.0
        %702 = vmatpush1.msra.mxu0 0.0
        %703 = vmatprep.subr.mxu0 0.0
        %704 = vmatpush1.msra.mxu0 0.0
        %705 = vmatprep.subr.mxu0 0.0
        %706 = vmatpush1.msra.mxu0 0.0
        %707 = vmatprep.subr.mxu0 0.0
        %708 = vmatpush1.msra.mxu0 0.0
        %709 = vmatprep.subr.mxu0 0.0
        %710 = vmatpush1.msra.mxu0 0.0
        %711 = vmatprep.mubr.f32.mxu0 0.0
        %712 = vmatmul.mubr.f32.gmra.mrb[0].mxu0 %v639
        %v713 = vpop.f32.mrb[0].mxu0
        %v714 = vadd.f32 %v636, %v713
        %v715 = vpop.f32.mrb[0].mxu0
        %v716 = vadd.f32 %v636, %v715
        %717 = vdwg.mxu0
        %718 = vrot.lane.b32.xlu0 %v714, 17
        %v719 = vpop.permute.xlu0 %718
        %720 = vrot.lane.b32.xlu0 %v716, 17
        %v721 = vpop.permute.xlu0 %720
        %v722 = vsel %vm239, %v719, %v721
        %v723 = vsel %vm239, %v721, %v719
        %v724 = vmul.f32 %v723, %v247
        %v725 = vmul.f32 %v722, %v251
        %726 = vrot.lane.b32.xlu0 %v714, 16
        %v727 = vpop.permute.xlu0 %726
        %728 = vrot.lane.b32.xlu0 %v716, 16
        %v729 = vpop.permute.xlu0 %728
        %v730 = vsel %vm260, %v727, %v729
        %v731 = vsel %vm260, %v729, %v727
        %v732 = vmul.f32 %v731, %v269
        %v733 = vmul.f32 %v730, %v273
        %734 = vrot.lane.b32.xlu0 %v714, 15
        %v735 = vpop.permute.xlu0 %734
        %736 = vrot.lane.b32.xlu0 %v716, 15
        %v737 = vpop.permute.xlu0 %736
        %v738 = vsel %vm282, %v735, %v737
        %v739 = vsel %vm282, %v737, %v735
        %v740 = vmul.f32 %v739, %v291
        %v741 = vmul.f32 %v738, %v295
        %742 = vrot.lane.b32.xlu0 %v714, 1
        %v743 = vpop.permute.xlu0 %742
        %744 = vrot.lane.b32.xlu0 %v716, 1
        %v745 = vpop.permute.xlu0 %744
        %v746 = vsel %vm304, %v743, %v745
        %v747 = vsel %vm304, %v745, %v743
        %v748 = vmul.f32 %v747, %v313
        %v749 = vmul.f32 %v746, %v317
        %750 = vrot.lane.b32.xlu0 %v714, 127
        %v751 = vpop.permute.xlu0 %750
        %752 = vrot.lane.b32.xlu0 %v716, 127
        %v753 = vpop.permute.xlu0 %752
        %v754 = vsel %vm326, %v751, %v753
        %v755 = vsel %vm326, %v753, %v751
        %v756 = vmul.f32 %v754, %v335
        %v757 = vmul.f32 %v755, %v339
        %758 = vrot.lane.b32.xlu0 %v714, 113
        %v759 = vpop.permute.xlu0 %758
        %760 = vrot.lane.b32.xlu0 %v716, 113
        %v761 = vpop.permute.xlu0 %760
        %v762 = vsel %vm348, %v759, %v761
        %v763 = vsel %vm348, %v761, %v759
        %v764 = vmul.f32 %v762, %v357
        %v765 = vmul.f32 %v763, %v361
        %766 = vrot.lane.b32.xlu0 %v714, 112
        %v767 = vpop.permute.xlu0 %766
        %768 = vrot.lane.b32.xlu0 %v716, 112
        %v769 = vpop.permute.xlu0 %768
        %v770 = vsel %vm370, %v767, %v769
        %v771 = vsel %vm370, %v769, %v767
        %v772 = vmul.f32 %v770, %v379
        %v773 = vmul.f32 %v771, %v383
        %774 = vrot.lane.b32.xlu0 %v714, 111
        %v775 = vpop.permute.xlu0 %774
        %776 = vrot.lane.b32.xlu0 %v716, 111
        %v777 = vpop.permute.xlu0 %776
        %v778 = vsel %vm392, %v775, %v777
        %v779 = vsel %vm392, %v777, %v775
        %v780 = vmul.f32 %v778, %v401
        %v781 = vmul.f32 %v779, %v405
        %v784 = vrot.slane %v732, 4
        %v785 = vrot.slane %v733, 4
        %v790 = vrot.slane %v748, 4
        %v791 = vrot.slane %v749, 4
        %v796 = vrot.slane %v756, 4
        %v797 = vrot.slane %v757, 4
        %v802 = vrot.slane %v772, 4
        %v803 = vrot.slane %v773, 4
        %v806 = vsel %vm434, %v724, %v784
        %v807 = vsel %vm434, %v725, %v785
        %v808 = vsel %vm434, %v740, %v790
        %v809 = vsel %vm434, %v741, %v791
        %v810 = vsel %vm434, %v714, %v796
        %v811 = vsel %vm434, %v716, %v797
        %v812 = vsel %vm434, %v764, %v802
        %v813 = vsel %vm434, %v765, %v803
        %s814 = scalar_lea.vmem [#allocation5], 8
        %v815 = vld [vmem:[%s814] sm:$0xf]
        %s816 = scalar_lea.vmem %s2, 8
        %v817 = vld [vmem:[%s816] sm:$0xf]
        %819 = vset.pattern.permute.xlu0 0
        %820 = vperm.xlu0 %819, %v817
        %v821 = vpop.permute.xlu0 %820
        %v824 = vsel %vm450, %v815, 0
        %v827 = vsel %vm434, %v780, 0
        %v830 = vsel %vm434, %v781, 0
        %832 = vmatprep.subr.mxu0 %v807
        %833 = vmatpush1.msra.mxu0 %v806
        %834 = vmatprep.subr.mxu0 %v809
        %835 = vmatpush1.msra.mxu0 %v808
        %836 = vmatprep.subr.mxu0 %v811
        %837 = vmatpush1.msra.mxu0 %v810
        %838 = vmatprep.subr.mxu0 %v813
        %839 = vmatpush1.msra.mxu0 %v812
        %840 = vmatprep.subr.mxu0 %v830
        %841 = vmatpush1.msra.mxu0 %v827
        %842 = vmatprep.subr.mxu0 0.0
        %843 = vmatpush1.msra.mxu0 0.0
        %844 = vmatprep.subr.mxu0 0.0
        %845 = vmatpush1.msra.mxu0 0.0
        %846 = vmatprep.subr.mxu0 0.0
        %847 = vmatpush1.msra.mxu0 0.0
        %848 = vmatprep.subr.mxu0 0.0
        %849 = vmatpush1.msra.mxu0 0.0
        %850 = vmatprep.subr.mxu0 0.0
        %851 = vmatpush1.msra.mxu0 0.0
        %852 = vmatprep.subr.mxu0 0.0
        %853 = vmatpush1.msra.mxu0 0.0
        %854 = vmatprep.subr.mxu0 0.0
        %855 = vmatpush1.msra.mxu0 0.0
        %856 = vmatprep.subr.mxu0 0.0
        %857 = vmatpush1.msra.mxu0 0.0
        %858 = vmatprep.subr.mxu0 0.0
        %859 = vmatpush1.msra.mxu0 0.0
        %860 = vmatprep.subr.mxu0 0.0
        %861 = vmatpush1.msra.mxu0 0.0
        %862 = vmatprep.subr.mxu0 0.0
        %863 = vmatpush1.msra.mxu0 0.0
        %864 = vmatprep.subr.mxu0 0.0
        %865 = vmatpush1.msra.mxu0 0.0
        %866 = vmatprep.subr.mxu0 0.0
        %867 = vmatpush1.msra.mxu0 0.0
        %868 = vmatprep.subr.mxu0 0.0
        %869 = vmatpush1.msra.mxu0 0.0
        %870 = vmatprep.subr.mxu0 0.0
        %871 = vmatpush1.msra.mxu0 0.0
        %872 = vmatprep.subr.mxu0 0.0
        %873 = vmatpush1.msra.mxu0 0.0
        %874 = vmatprep.subr.mxu0 0.0
        %875 = vmatpush1.msra.mxu0 0.0
        %876 = vmatprep.subr.mxu0 0.0
        %877 = vmatpush1.msra.mxu0 0.0
        %878 = vmatprep.subr.mxu0 0.0
        %879 = vmatpush1.msra.mxu0 0.0
        %880 = vmatprep.subr.mxu0 0.0
        %881 = vmatpush1.msra.mxu0 0.0
        %882 = vmatprep.subr.mxu0 0.0
        %883 = vmatpush1.msra.mxu0 0.0
        %884 = vmatprep.subr.mxu0 0.0
        %885 = vmatpush1.msra.mxu0 0.0
        %886 = vmatprep.subr.mxu0 0.0
        %887 = vmatpush1.msra.mxu0 0.0
        %888 = vmatprep.subr.mxu0 0.0
        %889 = vmatpush1.msra.mxu0 0.0
        %890 = vmatprep.subr.mxu0 0.0
        %891 = vmatpush1.msra.mxu0 0.0
        %892 = vmatprep.subr.mxu0 0.0
        %893 = vmatpush1.msra.mxu0 0.0
        %894 = vmatprep.subr.mxu0 0.0
        %895 = vmatpush1.msra.mxu0 0.0
        %896 = vmatprep.mubr.f32.mxu0 0.0
        %897 = vmatmul.mubr.f32.gmra.mrb[0].mxu0 %v824
        %v898 = vpop.f32.mrb[0].mxu0
        %v899 = vadd.f32 %v821, %v898
        %v900 = vpop.f32.mrb[0].mxu0
        %v901 = vadd.f32 %v821, %v900
        %902 = vdwg.mxu0
        %903 = vrot.lane.b32.xlu0 %v899, 17
        %v904 = vpop.permute.xlu0 %903
        %905 = vrot.lane.b32.xlu0 %v901, 17
        %v906 = vpop.permute.xlu0 %905
        %v907 = vsel %vm239, %v904, %v906
        %v908 = vsel %vm239, %v906, %v904
        %v909 = vmul.f32 %v908, %v247
        %v910 = vmul.f32 %v907, %v251
        %911 = vrot.lane.b32.xlu0 %v899, 16
        %v912 = vpop.permute.xlu0 %911
        %913 = vrot.lane.b32.xlu0 %v901, 16
        %v914 = vpop.permute.xlu0 %913
        %v915 = vsel %vm260, %v912, %v914
        %v916 = vsel %vm260, %v914, %v912
        %v917 = vmul.f32 %v916, %v269
        %v918 = vmul.f32 %v915, %v273
        %919 = vrot.lane.b32.xlu0 %v899, 15
        %v920 = vpop.permute.xlu0 %919
        %921 = vrot.lane.b32.xlu0 %v901, 15
        %v922 = vpop.permute.xlu0 %921
        %v923 = vsel %vm282, %v920, %v922
        %v924 = vsel %vm282, %v922, %v920
        %v925 = vmul.f32 %v924, %v291
        %v926 = vmul.f32 %v923, %v295
        %927 = vrot.lane.b32.xlu0 %v899, 1
        %v928 = vpop.permute.xlu0 %927
        %929 = vrot.lane.b32.xlu0 %v901, 1
        %v930 = vpop.permute.xlu0 %929
        %v931 = vsel %vm304, %v928, %v930
        %v932 = vsel %vm304, %v930, %v928
        %v933 = vmul.f32 %v932, %v313
        %v934 = vmul.f32 %v931, %v317
        %935 = vrot.lane.b32.xlu0 %v899, 127
        %v936 = vpop.permute.xlu0 %935
        %937 = vrot.lane.b32.xlu0 %v901, 127
        %v938 = vpop.permute.xlu0 %937
        %v939 = vsel %vm326, %v936, %v938
        %v940 = vsel %vm326, %v938, %v936
        %v941 = vmul.f32 %v939, %v335
        %v942 = vmul.f32 %v940, %v339
        %943 = vrot.lane.b32.xlu0 %v899, 113
        %v944 = vpop.permute.xlu0 %943
        %945 = vrot.lane.b32.xlu0 %v901, 113
        %v946 = vpop.permute.xlu0 %945
        %v947 = vsel %vm348, %v944, %v946
        %v948 = vsel %vm348, %v946, %v944
        %v949 = vmul.f32 %v947, %v357
        %v950 = vmul.f32 %v948, %v361
        %951 = vrot.lane.b32.xlu0 %v899, 112
        %v952 = vpop.permute.xlu0 %951
        %953 = vrot.lane.b32.xlu0 %v901, 112
        %v954 = vpop.permute.xlu0 %953
        %v955 = vsel %vm370, %v952, %v954
        %v956 = vsel %vm370, %v954, %v952
        %v957 = vmul.f32 %v955, %v379
        %v958 = vmul.f32 %v956, %v383
        %959 = vrot.lane.b32.xlu0 %v899, 111
        %v960 = vpop.permute.xlu0 %959
        %961 = vrot.lane.b32.xlu0 %v901, 111
        %v962 = vpop.permute.xlu0 %961
        %v963 = vsel %vm392, %v960, %v962
        %v964 = vsel %vm392, %v962, %v960
        %v965 = vmul.f32 %v963, %v401
        %v966 = vmul.f32 %v964, %v405
        %v969 = vrot.slane %v917, 4
        %v970 = vrot.slane %v918, 4
        %v975 = vrot.slane %v933, 4
        %v976 = vrot.slane %v934, 4
        %v981 = vrot.slane %v941, 4
        %v982 = vrot.slane %v942, 4
        %v987 = vrot.slane %v957, 4
        %v988 = vrot.slane %v958, 4
        %v991 = vsel %vm434, %v909, %v969
        %v992 = vsel %vm434, %v910, %v970
        %v993 = vsel %vm434, %v925, %v975
        %v994 = vsel %vm434, %v926, %v976
        %v995 = vsel %vm434, %v899, %v981
        %v996 = vsel %vm434, %v901, %v982
        %v997 = vsel %vm434, %v949, %v987
        %v998 = vsel %vm434, %v950, %v988
        %s999 = scalar_lea.vmem [#allocation5], 12
        %v1000 = vld [vmem:[%s999] sm:$0xf]
        %s1001 = scalar_lea.vmem %s2, 12
        %v1002 = vld [vmem:[%s1001] sm:$0xf]
        %1004 = vset.pattern.permute.xlu0 0
        %1005 = vperm.xlu0 %1004, %v1002
        %v1006 = vpop.permute.xlu0 %1005
        %v1009 = vsel %vm450, %v1000, 0
        %v1012 = vsel %vm434, %v965, 0
        %v1015 = vsel %vm434, %v966, 0
        %1017 = vmatprep.subr.mxu0 %v992
        %1018 = vmatpush1.msra.mxu0 %v991
        %1019 = vmatprep.subr.mxu0 %v994
        %1020 = vmatpush1.msra.mxu0 %v993
        %1021 = vmatprep.subr.mxu0 %v996
        %1022 = vmatpush1.msra.mxu0 %v995
        %1023 = vmatprep.subr.mxu0 %v998
        %1024 = vmatpush1.msra.mxu0 %v997
        %1025 = vmatprep.subr.mxu0 %v1015
        %1026 = vmatpush1.msra.mxu0 %v1012
        %1027 = vmatprep.subr.mxu0 0.0
        %1028 = vmatpush1.msra.mxu0 0.0
        %1029 = vmatprep.subr.mxu0 0.0
        %1030 = vmatpush1.msra.mxu0 0.0
        %1031 = vmatprep.subr.mxu0 0.0
        %1032 = vmatpush1.msra.mxu0 0.0
        %1033 = vmatprep.subr.mxu0 0.0
        %1034 = vmatpush1.msra.mxu0 0.0
        %1035 = vmatprep.subr.mxu0 0.0
        %1036 = vmatpush1.msra.mxu0 0.0
        %1037 = vmatprep.subr.mxu0 0.0
        %1038 = vmatpush1.msra.mxu0 0.0
        %1039 = vmatprep.subr.mxu0 0.0
        %1040 = vmatpush1.msra.mxu0 0.0
        %1041 = vmatprep.subr.mxu0 0.0
        %1042 = vmatpush1.msra.mxu0 0.0
        %1043 = vmatprep.subr.mxu0 0.0
        %1044 = vmatpush1.msra.mxu0 0.0
        %1045 = vmatprep.subr.mxu0 0.0
        %1046 = vmatpush1.msra.mxu0 0.0
        %1047 = vmatprep.subr.mxu0 0.0
        %1048 = vmatpush1.msra.mxu0 0.0
        %1049 = vmatprep.subr.mxu0 0.0
        %1050 = vmatpush1.msra.mxu0 0.0
        %1051 = vmatprep.subr.mxu0 0.0
        %1052 = vmatpush1.msra.mxu0 0.0
        %1053 = vmatprep.subr.mxu0 0.0
        %1054 = vmatpush1.msra.mxu0 0.0
        %1055 = vmatprep.subr.mxu0 0.0
        %1056 = vmatpush1.msra.mxu0 0.0
        %1057 = vmatprep.subr.mxu0 0.0
        %1058 = vmatpush1.msra.mxu0 0.0
        %1059 = vmatprep.subr.mxu0 0.0
        %1060 = vmatpush1.msra.mxu0 0.0
        %1061 = vmatprep.subr.mxu0 0.0
        %1062 = vmatpush1.msra.mxu0 0.0
        %1063 = vmatprep.subr.mxu0 0.0
        %1064 = vmatpush1.msra.mxu0 0.0
        %1065 = vmatprep.subr.mxu0 0.0
        %1066 = vmatpush1.msra.mxu0 0.0
        %1067 = vmatprep.subr.mxu0 0.0
        %1068 = vmatpush1.msra.mxu0 0.0
        %1069 = vmatprep.subr.mxu0 0.0
        %1070 = vmatpush1.msra.mxu0 0.0
        %1071 = vmatprep.subr.mxu0 0.0
        %1072 = vmatpush1.msra.mxu0 0.0
        %1073 = vmatprep.subr.mxu0 0.0
        %1074 = vmatpush1.msra.mxu0 0.0
        %1075 = vmatprep.subr.mxu0 0.0
        %1076 = vmatpush1.msra.mxu0 0.0
        %1077 = vmatprep.subr.mxu0 0.0
        %1078 = vmatpush1.msra.mxu0 0.0
        %1079 = vmatprep.subr.mxu0 0.0
        %1080 = vmatpush1.msra.mxu0 0.0
        %1081 = vmatprep.mubr.f32.mxu0 0.0
        %1082 = vmatmul.mubr.f32.gmra.mrb[0].mxu0 %v1009
        %v1083 = vpop.f32.mrb[0].mxu0
        %v1084 = vadd.f32 %v1006, %v1083
        %v1085 = vpop.f32.mrb[0].mxu0
        %v1086 = vadd.f32 %v1006, %v1085
        %1087 = vdwg.mxu0
        %v1090 = vcombine.low %v1084, %v1086
        %1092 = vst [vmem:[%s228] sm:$0xff] %v1090
        %s1093 = sand.u32 %s119, 1
        %s1094 = scalar_lea.sflag [#allocation4], %s1093
        %s1095 = sand.u32 %s119, 1
        %s1096 = smul.addr %s1095, 8
        %s1097 = scalar_lea.vmem [#allocation7], %s1096
        // Predicated region
        $region45: #{tpu_custom_call.1} parent=35 // pred_check
          %p1098 = pneg %p129
        $region46: #{tpu_custom_call.1} parent=35 // pred_check_branch
          %1100 = sbr.rel (%p1098) target = $region48
        $region47: #{tpu_custom_call.1} parent=35 // pred_region
          %s1102 = ssub.s32 128, 128
          %1103 = vsyncadd %s1094, %s1102
          %s1104 = smul.addr %s22, 2
          %s1105 = smul.addr %s1104, 64
          %s1106 = scalar_lea.hbm %s4, %s1105
          %s1108 = sshll.u32 %s1097, 4
          %s1109 = int_to_ptr.vmem [resolvable:$true] %s1108
          %1111 = dma.vmem_to_hbm [thread:$0]  %s1109, 128, %s1106, %s1094
        $region48: #{tpu_custom_call.1} parent=35 // pred_fallthru
          _
      $region36: #{tpu_custom_call.1} parent=5 // pred_fallthru
        _
      %p1112 = scmp.le.s32.totalorder 2, %s17
      // Predicated region
      $region49: #{tpu_custom_call.1} parent=5 // pred_check
        %p1113 = pneg %p1112
      $region50: #{tpu_custom_call.1} parent=5 // pred_check_branch
        %1115 = sbr.rel (%p1113) target = $region52
      $region51: #{tpu_custom_call.1} parent=5 // pred_region
        %s1116 = ssub.s32 %s17, 2
        // Predicated region
        $region53: #{tpu_custom_call.1} parent=51 // pred_check
          %p1117 = pneg %p135
        $region54: #{tpu_custom_call.1} parent=51 // pred_check_branch
          %1119 = sbr.rel (%p1117) target = $region56
        $region55: #{tpu_custom_call.1} parent=51 // pred_region
          %s1120 = sand.u32 %s120, 1
          %s1121 = scalar_lea.sflag [#allocation4], %s1120
          %s1122 = sand.u32 %s120, 1
          %s1123 = smul.addr %s1122, 8
          %s1124 = scalar_lea.vmem [#allocation7], %s1123
          %1125 = dma.done %s1121, 128
        $region56: #{tpu_custom_call.1} parent=51 // pred_fallthru
          _
      $region52: #{tpu_custom_call.1} parent=5 // pred_fallthru
        _
    $region6: #{tpu_custom_call.1} parent=1 // loop_footer
      %s21 = sadd.s32 1, %s17
    $region7: #{tpu_custom_call.1} parent=1 // loop_footer_branch
      %16 = sbr.rel target = $region3
    $region8: #{tpu_custom_call.1} parent=1 // loop_exit
      _
    %1126 = vsyncpa [#allocation3], 1
    %s1127 = scalar_lea.sflag [#allocation3], 1
    %1128 = vsyncpa %s1127, 1
    %1129 = vsyncpa [#allocation6], 1
    %1130 = vsyncpa [#allocation4], 1
    %s1131 = scalar_lea.sflag [#allocation4], 1
    %1132 = vsyncpa %s1131, 1

</llo_original>
